<compile_context>
chip_gen: v7x
topology: tpu7x:2x2x1
jax: 0.10.0
libtpu: 0.0.40
codegen_flags: <defaults>
</compile_context>

<pallas_src>
import math

import jax
import jax.numpy as jnp
from jax.experimental import pallas as pl
from jax.experimental.pallas import tpu as pltpu

_ROW_TILE = 1024                       # rows of the flattened (node, batch, time) axis per step
_COL_TILE = 512                        # columns per step of the graph matmul
_VMEM_LIMIT_BYTES = 32 * 1024 * 1024   # conservative: fits v5e/v6e/v7x scoped VMEM


def _compiler_params(n_grid_axes):
    return pltpu.CompilerParams(
        dimension_semantics=("parallel",) * n_grid_axes,
        vmem_limit_bytes=_VMEM_LIMIT_BYTES)


def _pick_tile(n, target):
    return n if n <= target else target


# ----------------------------- Pallas kernels ------------------------------ #

def _gated_conv(x, w, b, cout):
    """One fused MXU dot for the three (1,3) convs, then the TimeBlock gate.

    x: (R, 3*Cin) im2col rows, w: (3*Cin, 3*Cout) stacked [conv1|conv2|conv3],
    b: (1, 3*Cout).  Returns relu(c1 + sigmoid(c2) + c3): (R, Cout).
    """
    y = jnp.dot(x, w, preferred_element_type=jnp.float32) + b
    c1 = y[:, 0:cout]
    c2 = y[:, cout:2 * cout]
    c3 = y[:, 2 * cout:]
    return jnp.maximum(c1 + jax.nn.sigmoid(c2) + c3, 0.0)


def _temporal_theta_kernel(x_ref, w_ref, b_ref, th_ref, o_ref):
    """TimeBlock1 fused with the Theta1 matmul (graph matmul reassociated out)."""
    cout = w_ref.shape[1] // 3
    t = _gated_conv(x_ref[...], w_ref[...], b_ref[...], cout)
    # No relu here: relu(lfs @ Theta) == relu(A @ (t @ Theta)) happens after A_hat.
    o_ref[...] = jnp.dot(t, th_ref[...], preferred_element_type=jnp.float32)


def _temporal_kernel(x_ref, w_ref, b_ref, o_ref):
    """TimeBlock2."""
    cout = w_ref.shape[1] // 3
    o_ref[...] = _gated_conv(x_ref[...], w_ref[...], b_ref[...], cout)


def _graph_relu_kernel(a_ref, u_ref, o_ref):
    """t2 = relu(A_hat @ u) for one node-major column tile."""
    o_ref[...] = jnp.maximum(
        jnp.dot(a_ref[...], u_ref[...], preferred_element_type=jnp.float32), 0.0)


def _bn_kernel(x_ref, g_ref, b_ref, o_ref):
    """BatchNorm2d(num_nodes), training-mode batch stats, one node per grid step.

    x_ref/o_ref: (B, To, C) slab of one node; gamma/beta scalars read from SMEM.
    TODO(synk): if B*To*C grows very large, tile the columns with partial-sum
    scratch accumulators instead of one whole-slab reduction.
    """
    x = x_ref[...]
    cnt = x.shape[0] * x.shape[1] * x.shape[2]
    mean = jnp.sum(x) / cnt
    d = x - mean
    var = jnp.sum(d * d) / cnt
    inv = jax.lax.rsqrt(var + 1e-5)
    n = pl.program_id(0)
    o_ref[...] = d * (inv * g_ref[n]) + b_ref[n]


# ------------------------------ JAX wrappers -------------------------------- #

def _fuse_conv_params(w1, w2, w3, b1, b2, b3):
    """Stack three (3, Cin, Cout) conv weights into (3*Cin, 3*Cout) + (1, 3*Cout)."""
    k, cin, cout = w1.shape
    w_big = jnp.concatenate([w.reshape(k * cin, cout) for w in (w1, w2, w3)], axis=1)
    b_big = jnp.concatenate([b1, b2, b3]).reshape(1, 3 * cout)
    return w_big, b_big


def _im2col_time(x_nm):
    """(N, B, T, C) -> (N*B*(T-2), 3*C); one fused XLA pass (no 3 separate copies)."""
    n, b, t, c = x_nm.shape
    to = t - 2
    xc = jnp.concatenate([x_nm[:, :, k:k + to, :] for k in range(3)], axis=-1)
    return xc.reshape(n * b * to, 3 * c), to


def temporal1_theta(x_nm, w_big, b_big, theta):
    """u = TimeBlock1(x) @ Theta1.  x_nm: (N, B, T, Cin) -> (N, B, T-2, Csp)."""
    N, B, T, Cin = x_nm.shape
    csp = theta.shape[1]
    cout3 = w_big.shape[1]
    cout = cout3 // 3

    xc, To = _im2col_time(x_nm)
    M = N * B * To
    rt = _pick_tile(M, _ROW_TILE)

    cost = pl.CostEstimate(
        flops=2 * M * 3 * Cin * cout3 + 2 * M * cout * csp + 6 * M * cout,
        transcendentals=M * cout,
        bytes_accessed=4 * (M * 3 * Cin + M * csp + 3 * Cin * cout3 + cout3 + cout * csp))

    out = pl.pallas_call(
        _temporal_theta_kernel,
        out_shape=jax.ShapeDtypeStruct((M, csp), jnp.float32),
        grid=(pl.cdiv(M, rt),),
        in_specs=[
            pl.BlockSpec((rt, 3 * Cin), lambda i: (i, 0)),      # pipelined row tiles
            pl.BlockSpec((3 * Cin, cout3), lambda i: (0, 0)),   # fused conv weights (resident)
            pl.BlockSpec((1, cout3), lambda i: (0, 0)),         # fused biases (resident)
            pl.BlockSpec((cout, csp), lambda i: (0, 0)),        # Theta1 (resident)
        ],
        out_specs=pl.BlockSpec((rt, csp), lambda i: (i, 0)),
        compiler_params=_compiler_params(1),
        cost_estimate=cost,
    )(xc, w_big, b_big, theta)
    return out.reshape(N, B, To, csp)


def graph_relu(A_hat, u_nm):
    """t2 = relu(A_hat @ u): single 2-D matmul over node-major u, column-tiled."""
    N, B, To, Csp = u_nm.shape
    K = B * To * Csp
    u2 = u_nm.reshape(N, K)                       # free: node axis already leading
    ct = _pick_tile(K, _COL_TILE)

    cost = pl.CostEstimate(flops=2 * N * N * K + N * K, transcendentals=0,
                           bytes_accessed=4 * (N * N + 2 * N * K))

    out = pl.pallas_call(
        _graph_relu_kernel,
        out_shape=jax.ShapeDtypeStruct((N, K), jnp.float32),
        grid=(pl.cdiv(K, ct),),
        in_specs=[
            pl.BlockSpec((N, N), lambda j: (0, 0)),   # A_hat DMA'd once, VMEM-resident
            pl.BlockSpec((N, ct), lambda j: (0, j)),
        ],
        out_specs=pl.BlockSpec((N, ct), lambda j: (0, j)),
        compiler_params=_compiler_params(1),
        cost_estimate=cost,
    )(A_hat, u2)
    return out.reshape(N, B, To, Csp)


def temporal2(x_nm, w_big, b_big):
    """TimeBlock2.  x_nm: (N, B, T, Csp) -> (N, B, T-2, Cout)."""
    N, B, T, Cin = x_nm.shape
    cout3 = w_big.shape[1]
    cout = cout3 // 3

    xc, To = _im2col_time(x_nm)
    M = N * B * To
    rt = _pick_tile(M, _ROW_TILE)

    cost = pl.CostEstimate(
        flops=2 * M * 3 * Cin * cout3 + 6 * M * cout,
        transcendentals=M * cout,
        bytes_accessed=4 * (M * 3 * Cin + M * cout + 3 * Cin * cout3 + cout3))

    out = pl.pallas_call(
        _temporal_kernel,
        out_shape=jax.ShapeDtypeStruct((M, cout), jnp.float32),
        grid=(pl.cdiv(M, rt),),
        in_specs=[
            pl.BlockSpec((rt, 3 * Cin), lambda i: (i, 0)),
            pl.BlockSpec((3 * Cin, cout3), lambda i: (0, 0)),
            pl.BlockSpec((1, cout3), lambda i: (0, 0)),
        ],
        out_specs=pl.BlockSpec((rt, cout), lambda i: (i, 0)),
        compiler_params=_compiler_params(1),
        cost_estimate=cost,
    )(xc, w_big, b_big)
    return out.reshape(N, B, To, cout)


def batch_norm_nodes(t3_nm, gamma, beta):
    """BatchNorm2d(num_nodes), training-mode batch statistics.

    Input is node-major (N, B, To, C); output is written batch-major
    (B, N, To, C) via the out_spec index_map — no wrapper transpose.
    TODO(synk): running_mean/running_var buffer updates of nn.BatchNorm2d are
    stateful and not modeled.
    """
    N, B, To, C = t3_nm.shape
    cost = pl.CostEstimate(flops=8 * N * B * To * C, transcendentals=N,
                           bytes_accessed=8 * N * B * To * C)
    return pl.pallas_call(
        _bn_kernel,
        out_shape=jax.ShapeDtypeStruct((B, N, To, C), jnp.float32),
        grid=(N,),
        in_specs=[
            pl.BlockSpec((None, B, To, C), lambda n: (n, 0, 0, 0)),   # node n's slab
            pl.BlockSpec(memory_space=pltpu.MemorySpace.SMEM),        # gamma
            pl.BlockSpec(memory_space=pltpu.MemorySpace.SMEM),        # beta
        ],
        out_specs=pl.BlockSpec((B, None, To, C), lambda n: (0, n, 0, 0)),
        compiler_params=_compiler_params(1),
        cost_estimate=cost,
    )(t3_nm, gamma, beta)


def stgcn_block_forward(X, A_hat, p):
    """X: (B, N, T, Cin), A_hat: (N, N) -> (B, N, T-4, Cout)."""
    w1_big, b1_big = _fuse_conv_params(p['t1_w1'], p['t1_w2'], p['t1_w3'],
                                       p['t1_b1'], p['t1_b2'], p['t1_b3'])
    w2_big, b2_big = _fuse_conv_params(p['t2_w1'], p['t2_w2'], p['t2_w3'],
                                       p['t2_b1'], p['t2_b2'], p['t2_b3'])
    # Node-major layout for the whole block; the only explicit transpose is on
    # the small Cin-wide input and fuses into the im2col concat.
    x_nm = jnp.transpose(X, (1, 0, 2, 3))                       # (N, B, T, Cin)
    u = temporal1_theta(x_nm, w1_big, b1_big, p['theta1'])      # TimeBlock1 @ Theta1
    t2 = graph_relu(A_hat, u)                                   # relu(A_hat @ u)
    t3 = temporal2(t2, w2_big, b2_big)                          # TimeBlock2
    return batch_norm_nodes(t3, p['bn_gamma'], p['bn_beta'])    # (B, N, T-4, Cout)


# ------------------------- parameter initialization ------------------------- #

def init_params(key, cin, csp, cout, num_nodes):
    ks = jax.random.split(key, 13)

    def u(k, shape, fan):
        bound = 1.0 / math.sqrt(fan)
        return jax.random.uniform(k, shape, jnp.float32, -bound, bound)

    return {
        # temporal1: Conv2d(cin, cout, (1,3)) x3 — weights stored as (3, Cin, Cout)
        't1_w1': u(ks[0], (3, cin, cout), cin * 3),
        't1_w2': u(ks[1], (3, cin, cout), cin * 3),
        't1_w3': u(ks[2], (3, cin, cout), cin * 3),
        't1_b1': u(ks[3], (cout,), cin * 3),
        't1_b2': u(ks[4], (cout,), cin * 3),
        't1_b3': u(ks[5], (cout,), cin * 3),
        'theta1': u(ks[6], (cout, csp), csp),
        # temporal2: Conv2d(csp, cout, (1,3)) x3
        't2_w1': u(ks[7], (3, csp, cout), csp * 3),
        't2_w2': u(ks[8], (3, csp, cout), csp * 3),
        't2_w3': u(ks[9], (3, csp, cout), csp * 3),
        't2_b1': u(ks[10], (cout,), csp * 3),
        't2_b2': u(ks[11], (cout,), csp * 3),
        't2_b3': u(ks[12], (cout,), csp * 3),
        # BatchNorm2d(num_nodes) default affine init
        'bn_gamma': jnp.ones((num_nodes,), jnp.float32),
        'bn_beta': jnp.zeros((num_nodes,), jnp.float32),
    }


# ------------------------------- pure-JAX ref ------------------------------- #

def reference_forward(X, A_hat, p):
    hp = jax.lax.Precision.HIGHEST

    def tb(x, w1, w2, w3, b1, b2, b3):
        To = x.shape[2] - 2

        def conv(w, b):
            y = sum(jnp.einsum('bntc,cd->bntd', x[:, :, k:k + To, :], w[k],
                               precision=hp) for k in range(3))
            return y + b

        return jax.nn.relu(conv(w1, b1) + jax.nn.sigmoid(conv(w2, b2))
                           + conv(w3, b3))

    t = tb(X, p['t1_w1'], p['t1_w2'], p['t1_w3'],
           p['t1_b1'], p['t1_b2'], p['t1_b3'])
    lfs = jnp.einsum('ij,bjtc->bitc', A_hat, t, precision=hp)
    t2 = jax.nn.relu(jnp.einsum('bitc,cd->bitd', lfs, p['theta1'], precision=hp))
    t3 = tb(t2, p['t2_w1'], p['t2_w2'], p['t2_w3'],
            p['t2_b1'], p['t2_b2'], p['t2_b3'])
    mean = jnp.mean(t3, axis=(0, 2, 3), keepdims=True)
    var = jnp.mean((t3 - mean) ** 2, axis=(0, 2, 3), keepdims=True)
    g = p['bn_gamma'].reshape(1, -1, 1, 1)
    b = p['bn_beta'].reshape(1, -1, 1, 1)
    return g * (t3 - mean) / jnp.sqrt(var + 1e-5) + b


# ----------------------------------- main ----------------------------------- #

if __name__ == "__main__":
    B, N, T = 2, 16, 12
    Cin, Csp, Cout = 4, 8, 16

    key = jax.random.PRNGKey(0)
    kx, ka, kp = jax.random.split(key, 3)

    X = jax.random.normal(kx, (B, N, T, Cin), jnp.float32)
    A = jax.random.uniform(ka, (N, N), jnp.float32)
    A_hat = A / jnp.sum(A, axis=1, keepdims=True)  # row-normalized adjacency

    params = init_params(kp, Cin, Csp, Cout, N)

    out = jax.jit(stgcn_block_forward)(X, A_hat, params)
    out = jax.block_until_ready(out)

    assert out.shape == (B, N, T - 4, Cout), out.shape

    ref = reference_forward(X, A_hat, params)
    err = float(jnp.max(jnp.abs(out - ref)))
    assert jnp.allclose(out, ref, atol=2e-3, rtol=2e-3), f"max abs err = {err}"

    print("KERNEL_OK")
</pallas_src>

<mosaic_0001>
module attributes {stable_mosaic.version = 11 : i64} {
  func.func @_temporal_theta_kernel(%arg0: i32, %arg1: memref<320x12xf32, #tpu.memory_space<vmem>>, %arg2: memref<12x48xf32, #tpu.memory_space<vmem>>, %arg3: memref<1x48xf32, #tpu.memory_space<vmem>>, %arg4: memref<16x8xf32, #tpu.memory_space<vmem>>, %arg5: memref<320x8xf32, #tpu.memory_space<vmem>>) attributes {dimension_semantics = [#tpu.dimension_semantics<parallel>], iteration_bounds = array<i64: 1>, scalar_prefetch = 0 : i64, scratch_operands = 0 : i64, tpu.core_type = #tpu.core_type<tc>, window_params = [{transform_indices = @transform_0, window_bounds = array<i64: 320, 12>}, {pipeline_mode = #tpu.pipeline_mode<synchronous>, transform_indices = @transform_1, window_bounds = array<i64: 12, 48>}, {pipeline_mode = #tpu.pipeline_mode<synchronous>, transform_indices = @transform_2, window_bounds = array<i64: 1, 48>}, {pipeline_mode = #tpu.pipeline_mode<synchronous>, transform_indices = @transform_3, window_bounds = array<i64: 16, 8>}, {transform_indices = @transform_4, window_bounds = array<i64: 320, 8>}]} {
    %c0 = arith.constant 0 : index
    %c0_0 = arith.constant 0 : index
    %0 = vector.load %arg1[%c0, %c0_0] : memref<320x12xf32, #tpu.memory_space<vmem>>, vector<320x12xf32>
    %c0_1 = arith.constant 0 : index
    %c0_2 = arith.constant 0 : index
    %1 = vector.load %arg2[%c0_1, %c0_2] : memref<12x48xf32, #tpu.memory_space<vmem>>, vector<12x48xf32>
    %c0_3 = arith.constant 0 : index
    %c0_4 = arith.constant 0 : index
    %2 = vector.load %arg3[%c0_3, %c0_4] : memref<1x48xf32, #tpu.memory_space<vmem>>, vector<1x48xf32>
    %cst = arith.constant dense<0.000000e+00> : vector<320x48xf32>
    %3 = tpu.matmul %0, %1, %cst {dimension_numbers = #tpu.dot_dimension_numbers<[1], [0], [0], [1], [0, 0, 1, 1], [], []>} : vector<320x12xf32>, vector<12x48xf32>, vector<320x48xf32> -> vector<320x48xf32>
    %4 = vector.broadcast %2 : vector<1x48xf32> to vector<320x48xf32>
    %5 = arith.addf %3, %4 : vector<320x48xf32>
    %6 = vector.extract_strided_slice %5 {offsets = [0, 0], sizes = [320, 16], strides = [1, 1]} : vector<320x48xf32> to vector<320x16xf32>
    %7 = vector.extract_strided_slice %5 {offsets = [0, 16], sizes = [320, 16], strides = [1, 1]} : vector<320x48xf32> to vector<320x16xf32>
    %8 = vector.extract_strided_slice %5 {offsets = [0, 32], sizes = [320, 16], strides = [1, 1]} : vector<320x48xf32> to vector<320x16xf32>
    %9 = arith.negf %7 : vector<320x16xf32>
    %10 = math.exp %9 : vector<320x16xf32>
    %cst_5 = arith.constant 1.000000e+00 : f32
    %11 = vector.broadcast %cst_5 : f32 to vector<320x16xf32>
    %12 = arith.addf %11, %10 : vector<320x16xf32>
    %13 = arith.divf %11, %12 : vector<320x16xf32>
    %14 = arith.addf %6, %13 : vector<320x16xf32>
    %15 = arith.addf %14, %8 : vector<320x16xf32>
    %cst_6 = arith.constant 0.000000e+00 : f32
    %16 = vector.broadcast %cst_6 : f32 to vector<320x16xf32>
    %17 = arith.maximumf %15, %16 : vector<320x16xf32>
    %c0_7 = arith.constant 0 : index
    %c0_8 = arith.constant 0 : index
    %18 = vector.load %arg4[%c0_7, %c0_8] : memref<16x8xf32, #tpu.memory_space<vmem>>, vector<16x8xf32>
    %cst_9 = arith.constant dense<0.000000e+00> : vector<320x8xf32>
    %19 = tpu.matmul %17, %18, %cst_9 {dimension_numbers = #tpu.dot_dimension_numbers<[1], [0], [0], [1], [0, 0, 1, 1], [], []>} : vector<320x16xf32>, vector<16x8xf32>, vector<320x8xf32> -> vector<320x8xf32>
    %c0_10 = arith.constant 0 : index
    %c0_11 = arith.constant 0 : index
    %20 = vector.load %arg5[%c0_10, %c0_11] : memref<320x8xf32, #tpu.memory_space<vmem>>, vector<320x8xf32>
    tpu.vector_store %arg5[%c0_10, %c0_11], %19 {strides = array<i32>} : memref<320x8xf32, #tpu.memory_space<vmem>>, vector<320x8xf32>,
    return
  }
  func.func @transform_0(%arg0: i32) -> (i32, i32) {
    %c0_i32 = arith.constant 0 : i32
    %c0_i32_0 = arith.constant 0 : i32
    return %arg0, %c0_i32 : i32, i32
  }
  func.func @transform_1(%arg0: i32) -> (i32, i32) {
    %c0_i32 = arith.constant 0 : i32
    %c0_i32_0 = arith.constant 0 : i32
    %c0_i32_1 = arith.constant 0 : i32
    return %c0_i32, %c0_i32_0 : i32, i32
  }
  func.func @transform_2(%arg0: i32) -> (i32, i32) {
    %c0_i32 = arith.constant 0 : i32
    %c0_i32_0 = arith.constant 0 : i32
    %c0_i32_1 = arith.constant 0 : i32
    return %c0_i32, %c0_i32_0 : i32, i32
  }
  func.func @transform_3(%arg0: i32) -> (i32, i32) {
    %c0_i32 = arith.constant 0 : i32
    %c0_i32_0 = arith.constant 0 : i32
    %c0_i32_1 = arith.constant 0 : i32
    return %c0_i32, %c0_i32_0 : i32, i32
  }
  func.func @transform_4(%arg0: i32) -> (i32, i32) {
    %c0_i32 = arith.constant 0 : i32
    %c0_i32_0 = arith.constant 0 : i32
    return %arg0, %c0_i32 : i32, i32
  }
}

module attributes {stable_mosaic.version = 11 : i64} {
  func.func @_graph_relu_kernel(%arg0: i32, %arg1: memref<16x16xf32, #tpu.memory_space<vmem>>, %arg2: memref<16x160xf32, #tpu.memory_space<vmem>>, %arg3: memref<16x160xf32, #tpu.memory_space<vmem>>) attributes {dimension_semantics = [#tpu.dimension_semantics<parallel>], iteration_bounds = array<i64: 1>, scalar_prefetch = 0 : i64, scratch_operands = 0 : i64, tpu.core_type = #tpu.core_type<tc>, window_params = [{pipeline_mode = #tpu.pipeline_mode<synchronous>, transform_indices = @transform_0, window_bounds = array<i64: 16, 16>}, {transform_indices = @transform_1, window_bounds = array<i64: 16, 160>}, {transform_indices = @transform_2, window_bounds = array<i64: 16, 160>}]} {
    %c0 = arith.constant 0 : index
    %c0_0 = arith.constant 0 : index
    %0 = vector.load %arg1[%c0, %c0_0] : memref<16x16xf32, #tpu.memory_space<vmem>>, vector<16x16xf32>
    %c0_1 = arith.constant 0 : index
    %c0_2 = arith.constant 0 : index
    %1 = vector.load %arg2[%c0_1, %c0_2] : memref<16x160xf32, #tpu.memory_space<vmem>>, vector<16x160xf32>
    %cst = arith.constant dense<0.000000e+00> : vector<16x160xf32>
    %2 = tpu.matmul %0, %1, %cst {dimension_numbers = #tpu.dot_dimension_numbers<[1], [0], [0], [1], [0, 0, 1, 1], [], []>} : vector<16x16xf32>, vector<16x160xf32>, vector<16x160xf32> -> vector<16x160xf32>
    %cst_3 = arith.constant 0.000000e+00 : f32
    %3 = vector.broadcast %cst_3 : f32 to vector<16x160xf32>
    %4 = arith.maximumf %2, %3 : vector<16x160xf32>
    %c0_4 = arith.constant 0 : index
    %c0_5 = arith.constant 0 : index
    %5 = vector.load %arg3[%c0_4, %c0_5] : memref<16x160xf32, #tpu.memory_space<vmem>>, vector<16x160xf32>
    tpu.vector_store %arg3[%c0_4, %c0_5], %4 {strides = array<i32>} : memref<16x160xf32, #tpu.memory_space<vmem>>, vector<16x160xf32>,
    return
  }
  func.func @transform_0(%arg0: i32) -> (i32, i32) {
    %c0_i32 = arith.constant 0 : i32
    %c0_i32_0 = arith.constant 0 : i32
    %c0_i32_1 = arith.constant 0 : i32
    return %c0_i32, %c0_i32_0 : i32, i32
  }
  func.func @transform_1(%arg0: i32) -> (i32, i32) {
    %c0_i32 = arith.constant 0 : i32
    %c0_i32_0 = arith.constant 0 : i32
    return %c0_i32, %arg0 : i32, i32
  }
  func.func @transform_2(%arg0: i32) -> (i32, i32) {
    %c0_i32 = arith.constant 0 : i32
    %c0_i32_0 = arith.constant 0 : i32
    return %c0_i32, %arg0 : i32, i32
  }
}

module attributes {stable_mosaic.version = 11 : i64} {
  func.func @_temporal_kernel(%arg0: i32, %arg1: memref<256x24xf32, #tpu.memory_space<vmem>>, %arg2: memref<24x48xf32, #tpu.memory_space<vmem>>, %arg3: memref<1x48xf32, #tpu.memory_space<vmem>>, %arg4: memref<256x16xf32, #tpu.memory_space<vmem>>) attributes {dimension_semantics = [#tpu.dimension_semantics<parallel>], iteration_bounds = array<i64: 1>, scalar_prefetch = 0 : i64, scratch_operands = 0 : i64, tpu.core_type = #tpu.core_type<tc>, window_params = [{transform_indices = @transform_0, window_bounds = array<i64: 256, 24>}, {pipeline_mode = #tpu.pipeline_mode<synchronous>, transform_indices = @transform_1, window_bounds = array<i64: 24, 48>}, {pipeline_mode = #tpu.pipeline_mode<synchronous>, transform_indices = @transform_2, window_bounds = array<i64: 1, 48>}, {transform_indices = @transform_3, window_bounds = array<i64: 256, 16>}]} {
    %c0 = arith.constant 0 : index
    %c0_0 = arith.constant 0 : index
    %0 = vector.load %arg1[%c0, %c0_0] : memref<256x24xf32, #tpu.memory_space<vmem>>, vector<256x24xf32>
    %c0_1 = arith.constant 0 : index
    %c0_2 = arith.constant 0 : index
    %1 = vector.load %arg2[%c0_1, %c0_2] : memref<24x48xf32, #tpu.memory_space<vmem>>, vector<24x48xf32>
    %c0_3 = arith.constant 0 : index
    %c0_4 = arith.constant 0 : index
    %2 = vector.load %arg3[%c0_3, %c0_4] : memref<1x48xf32, #tpu.memory_space<vmem>>, vector<1x48xf32>
    %cst = arith.constant dense<0.000000e+00> : vector<256x48xf32>
    %3 = tpu.matmul %0, %1, %cst {dimension_numbers = #tpu.dot_dimension_numbers<[1], [0], [0], [1], [0, 0, 1, 1], [], []>} : vector<256x24xf32>, vector<24x48xf32>, vector<256x48xf32> -> vector<256x48xf32>
    %4 = vector.broadcast %2 : vector<1x48xf32> to vector<256x48xf32>
    %5 = arith.addf %3, %4 : vector<256x48xf32>
    %6 = vector.extract_strided_slice %5 {offsets = [0, 0], sizes = [256, 16], strides = [1, 1]} : vector<256x48xf32> to vector<256x16xf32>
    %7 = vector.extract_strided_slice %5 {offsets = [0, 16], sizes = [256, 16], strides = [1, 1]} : vector<256x48xf32> to vector<256x16xf32>
    %8 = vector.extract_strided_slice %5 {offsets = [0, 32], sizes = [256, 16], strides = [1, 1]} : vector<256x48xf32> to vector<256x16xf32>
    %9 = arith.negf %7 : vector<256x16xf32>
    %10 = math.exp %9 : vector<256x16xf32>
    %cst_5 = arith.constant 1.000000e+00 : f32
    %11 = vector.broadcast %cst_5 : f32 to vector<256x16xf32>
    %12 = arith.addf %11, %10 : vector<256x16xf32>
    %13 = arith.divf %11, %12 : vector<256x16xf32>
    %14 = arith.addf %6, %13 : vector<256x16xf32>
    %15 = arith.addf %14, %8 : vector<256x16xf32>
    %cst_6 = arith.constant 0.000000e+00 : f32
    %16 = vector.broadcast %cst_6 : f32 to vector<256x16xf32>
    %17 = arith.maximumf %15, %16 : vector<256x16xf32>
    %c0_7 = arith.constant 0 : index
    %c0_8 = arith.constant 0 : index
    %18 = vector.load %arg4[%c0_7, %c0_8] : memref<256x16xf32, #tpu.memory_space<vmem>>, vector<256x16xf32>
    tpu.vector_store %arg4[%c0_7, %c0_8], %17 {strides = array<i32>} : memref<256x16xf32, #tpu.memory_space<vmem>>, vector<256x16xf32>,
    return
  }
  func.func @transform_0(%arg0: i32) -> (i32, i32) {
    %c0_i32 = arith.constant 0 : i32
    %c0_i32_0 = arith.constant 0 : i32
    return %arg0, %c0_i32 : i32, i32
  }
  func.func @transform_1(%arg0: i32) -> (i32, i32) {
    %c0_i32 = arith.constant 0 : i32
    %c0_i32_0 = arith.constant 0 : i32
    %c0_i32_1 = arith.constant 0 : i32
    return %c0_i32, %c0_i32_0 : i32, i32
  }
  func.func @transform_2(%arg0: i32) -> (i32, i32) {
    %c0_i32 = arith.constant 0 : i32
    %c0_i32_0 = arith.constant 0 : i32
    %c0_i32_1 = arith.constant 0 : i32
    return %c0_i32, %c0_i32_0 : i32, i32
  }
  func.func @transform_3(%arg0: i32) -> (i32, i32) {
    %c0_i32 = arith.constant 0 : i32
    %c0_i32_0 = arith.constant 0 : i32
    return %arg0, %c0_i32 : i32, i32
  }
}

module attributes {stable_mosaic.version = 11 : i64} {
  func.func @_bn_kernel(%arg0: i32, %arg1: memref<1x2x8x16xf32, #tpu.memory_space<vmem>>, %arg2: memref<16xf32, #tpu.memory_space<smem>>, %arg3: memref<16xf32, #tpu.memory_space<smem>>, %arg4: memref<2x1x8x16xf32, #tpu.memory_space<vmem>>) attributes {dimension_semantics = [#tpu.dimension_semantics<parallel>], iteration_bounds = array<i64: 16>, scalar_prefetch = 0 : i64, scratch_operands = 0 : i64, tpu.core_type = #tpu.core_type<tc>, window_params = [{transform_indices = @transform_0, window_bounds = array<i64: 1, 2, 8, 16>}, {transform_indices = @transform_1, window_bounds = array<i64: 16>}, {transform_indices = @transform_2, window_bounds = array<i64: 16>}, {transform_indices = @transform_3, window_bounds = array<i64: 2, 1, 8, 16>}]} {
    %c0 = arith.constant 0 : index
    %c0_0 = arith.constant 0 : index
    %c0_1 = arith.constant 0 : index
    %c0_2 = arith.constant 0 : index
    %0 = vector.load %arg1[%c0, %c0_0, %c0_1, %c0_2] : memref<1x2x8x16xf32, #tpu.memory_space<vmem>>, vector<1x2x8x16xf32>
    %1 = vector.shape_cast %0 : vector<1x2x8x16xf32> to vector<2x8x16xf32>
    %2 = vector.shape_cast %1 : vector<2x8x16xf32> to vector<1x2x8x16xf32>
    %cst = arith.constant dense<0.000000e+00> : vector<1xf32>
    %3 = vector.multi_reduction <add>, %2, %cst [1, 2, 3] : vector<1x2x8x16xf32> to vector<1xf32>
    %4 = vector.shape_cast %3 : vector<1xf32> to vector<1x1x1x1xf32>
    %5 = vector.extract %4[0, 0, 0, 0] : f32 from vector<1x1x1x1xf32>
    %cst_3 = arith.constant 2.560000e+02 : f32
    %6 = arith.divf %5, %cst_3 : f32
    %7 = vector.broadcast %6 : f32 to vector<2x8x16xf32>
    %8 = arith.subf %1, %7 : vector<2x8x16xf32>
    %9 = arith.mulf %8, %8 : vector<2x8x16xf32>
    %10 = vector.shape_cast %9 : vector<2x8x16xf32> to vector<1x2x8x16xf32>
    %cst_4 = arith.constant dense<0.000000e+00> : vector<1xf32>
    %11 = vector.multi_reduction <add>, %10, %cst_4 [1, 2, 3] : vector<1x2x8x16xf32> to vector<1xf32>
    %12 = vector.shape_cast %11 : vector<1xf32> to vector<1x1x1x1xf32>
    %13 = vector.extract %12[0, 0, 0, 0] : f32 from vector<1x1x1x1xf32>
    %cst_5 = arith.constant 2.560000e+02 : f32
    %14 = arith.divf %13, %cst_5 : f32
    %cst_6 = arith.constant 9.99999974E-6 : f32
    %15 = arith.addf %14, %cst_6 : f32
    %16 = math.rsqrt %15 : f32
    %17 = arith.index_cast %arg0 : i32 to index
    %18 = memref.load %arg2[%17] : memref<16xf32, #tpu.memory_space<smem>>
    %19 = arith.mulf %16, %18 : f32
    %20 = vector.broadcast %19 : f32 to vector<2x8x16xf32>
    %21 = arith.mulf %8, %20 : vector<2x8x16xf32>
    %22 = arith.index_cast %arg0 : i32 to index
    %23 = memref.load %arg3[%22] : memref<16xf32, #tpu.memory_space<smem>>
    %24 = vector.broadcast %23 : f32 to vector<2x8x16xf32>
    %25 = arith.addf %21, %24 : vector<2x8x16xf32>
    %c0_7 = arith.constant 0 : index
    %c0_8 = arith.constant 0 : index
    %c0_9 = arith.constant 0 : index
    %c0_10 = arith.constant 0 : index
    %26 = vector.load %arg4[%c0_7, %c0_8, %c0_9, %c0_10] : memref<2x1x8x16xf32, #tpu.memory_space<vmem>>, vector<2x1x8x16xf32>
    %27 = vector.shape_cast %26 : vector<2x1x8x16xf32> to vector<2x8x16xf32>
    %28 = vector.shape_cast %25 : vector<2x8x16xf32> to vector<2x1x8x16xf32>
    tpu.vector_store %arg4[%c0_7, %c0_8, %c0_9, %c0_10], %28 {strides = array<i32>} : memref<2x1x8x16xf32, #tpu.memory_space<vmem>>, vector<2x1x8x16xf32>,
    return
  }
  func.func @transform_0(%arg0: i32) -> (i32, i32, i32, i32) {
    %c0_i32 = arith.constant 0 : i32
    %c0_i32_0 = arith.constant 0 : i32
    %c0_i32_1 = arith.constant 0 : i32
    %c0_i32_2 = arith.constant 0 : i32
    return %arg0, %c0_i32, %c0_i32_0, %c0_i32_1 : i32, i32, i32, i32
  }
  func.func @transform_1(%arg0: i32) -> i32 {
    %c0_i32 = arith.constant 0 : i32
    %c0_i32_0 = arith.constant 0 : i32
    return %c0_i32 : i32
  }
  func.func @transform_2(%arg0: i32) -> i32 {
    %c0_i32 = arith.constant 0 : i32
    %c0_i32_0 = arith.constant 0 : i32
    return %c0_i32 : i32
  }
  func.func @transform_3(%arg0: i32) -> (i32, i32, i32, i32) {
    %c0_i32 = arith.constant 0 : i32
    %c0_i32_0 = arith.constant 0 : i32
    %c0_i32_1 = arith.constant 0 : i32
    %c0_i32_2 = arith.constant 0 : i32
    return %c0_i32, %arg0, %c0_i32_0, %c0_i32_1 : i32, i32, i32, i32
  }
}

</mosaic_0001>

<llo_original>
// kernel: stgcn_block_forward.5
$region0: #{stgcn_block_forward.5}
  #allocation0 [shape = 'u32[]', space=smem, size = 0x4, offset = 0x4, fixed_abs, tag = 'smem constant byte address 0x4 - core index']
  #allocation1 [shape = 'u32[144,128]{1,0:T(1,128)}', space=vmem, size = 0x12000, scoped, tag = 'internal scratch']
  %s0 = inlined_call_operand.vmem [shape: f32[16,16], index: 0, kind: input, shape index: {}]
  %s1 = inlined_call_operand.vmem [shape: f32[16,160], index: 1, kind: input, shape index: {}]
  %s2 = inlined_call_operand.vmem [shape: f32[16,160], index: 2, kind: output, shape index: {}]
  %s3 = sld [smem:[#allocation0]]
  $region18: #{stgcn_block_forward.5} parent=0
    _
  %s5 = ssub.s32 1, %s3
  %s6 = scalar_select 0, %s5, %s3
  // Predicated region
  $region2: #{stgcn_block_forward.5} parent=0 // pred_check
    _
  $region3: #{stgcn_block_forward.5} parent=0 // pred_check_branch
    %8 = sbr.rel (0) target = $region5
  $region4: #{stgcn_block_forward.5} parent=0 // pred_region
    _
  $region5: #{stgcn_block_forward.5} parent=0 // pred_fallthru
    _
  // Predicated region
  $region6: #{stgcn_block_forward.5} parent=0 // pred_check
    _
  $region7: #{stgcn_block_forward.5} parent=0 // pred_check_branch
    %10 = sbr.rel (0) target = $region9
  $region8: #{stgcn_block_forward.5} parent=0 // pred_region
    _
  $region9: #{stgcn_block_forward.5} parent=0 // pred_fallthru
    _
  %v11 = vld [vmem:[%s0] sm:$0xff]
  %v12 = vld [vmem:[%s0 + $0x8] sm:$0xff]
  %v13 = vld [vmem:[%s1] sm:$0xff]
  %v14 = vld [vmem:[%s1 + $0x8] sm:$0xff]
  %v15 = vld [vmem:[%s1 + $0x10] sm:$0xff]
  %v16 = vld [vmem:[%s1 + $0x18] sm:$0xff]
  %vm17 = vcmask 130048
  %v19 = vsel %vm17, %v11, 0
  %v22 = vsel %vm17, %v12, 0
  %24 = vmatprep.subr.mxu0 %v14
  %25 = vmatpush1.msra.mxu0 %v13
  %26 = vmatprep.subr.mxu0 %v16
  %27 = vmatpush1.msra.mxu0 %v15
  %28 = vmatprep.subr.mxu0 0.0
  %29 = vmatpush1.msra.mxu0 0.0
  %30 = vmatprep.subr.mxu0 0.0
  %31 = vmatpush1.msra.mxu0 0.0
  %32 = vmatprep.subr.mxu0 0.0
  %33 = vmatpush1.msra.mxu0 0.0
  %34 = vmatprep.subr.mxu0 0.0
  %35 = vmatpush1.msra.mxu0 0.0
  %36 = vmatprep.subr.mxu0 0.0
  %37 = vmatpush1.msra.mxu0 0.0
  %38 = vmatprep.subr.mxu0 0.0
  %39 = vmatpush1.msra.mxu0 0.0
  %40 = vmatprep.subr.mxu0 0.0
  %41 = vmatpush1.msra.mxu0 0.0
  %42 = vmatprep.subr.mxu0 0.0
  %43 = vmatpush1.msra.mxu0 0.0
  %44 = vmatprep.subr.mxu0 0.0
  %45 = vmatpush1.msra.mxu0 0.0
  %46 = vmatprep.subr.mxu0 0.0
  %47 = vmatpush1.msra.mxu0 0.0
  %48 = vmatprep.subr.mxu0 0.0
  %49 = vmatpush1.msra.mxu0 0.0
  %50 = vmatprep.subr.mxu0 0.0
  %51 = vmatpush1.msra.mxu0 0.0
  %52 = vmatprep.subr.mxu0 0.0
  %53 = vmatpush1.msra.mxu0 0.0
  %54 = vmatprep.subr.mxu0 0.0
  %55 = vmatpush1.msra.mxu0 0.0
  %56 = vmatprep.subr.mxu0 0.0
  %57 = vmatpush1.msra.mxu0 0.0
  %58 = vmatprep.subr.mxu0 0.0
  %59 = vmatpush1.msra.mxu0 0.0
  %60 = vmatprep.subr.mxu0 0.0
  %61 = vmatpush1.msra.mxu0 0.0
  %62 = vmatprep.subr.mxu0 0.0
  %63 = vmatpush1.msra.mxu0 0.0
  %64 = vmatprep.subr.mxu0 0.0
  %65 = vmatpush1.msra.mxu0 0.0
  %66 = vmatprep.subr.mxu0 0.0
  %67 = vmatpush1.msra.mxu0 0.0
  %68 = vmatprep.subr.mxu0 0.0
  %69 = vmatpush1.msra.mxu0 0.0
  %70 = vmatprep.subr.mxu0 0.0
  %71 = vmatpush1.msra.mxu0 0.0
  %72 = vmatprep.subr.mxu0 0.0
  %73 = vmatpush1.msra.mxu0 0.0
  %74 = vmatprep.subr.mxu0 0.0
  %75 = vmatpush1.msra.mxu0 0.0
  %76 = vmatprep.subr.mxu0 0.0
  %77 = vmatpush1.msra.mxu0 0.0
  %78 = vmatprep.subr.mxu0 0.0
  %79 = vmatpush1.msra.mxu0 0.0
  %80 = vmatprep.subr.mxu0 0.0
  %81 = vmatpush1.msra.mxu0 0.0
  %82 = vmatprep.subr.mxu0 0.0
  %83 = vmatpush1.msra.mxu0 0.0
  %84 = vmatprep.subr.mxu0 0.0
  %85 = vmatpush1.msra.mxu0 0.0
  %86 = vmatprep.subr.mxu0 0.0
  %87 = vmatpush1.msra.mxu0 0.0
  %88 = vmatprep.mubr.f32.mxu0 0.0
  %89 = vmatmul.mubr.f32.gmra.mrb[0].mxu0 %v19
  %v90 = vpop.f32.mrb[0].mxu0
  %v91 = vadd.f32 0.0, %v90
  %v92 = vpop.f32.mrb[0].mxu0
  %v93 = vadd.f32 0.0, %v92
  %94 = vmatprep.mubr.f32.mxu0 0.0
  %95 = vmatmul.mubr.f32.gmra.mrb[0].mxu0 %v22
  %v96 = vpop.f32.mrb[0].mxu0
  %v97 = vadd.f32 0.0, %v96
  %v98 = vpop.f32.mrb[0].mxu0
  %v99 = vadd.f32 0.0, %v98
  %100 = vdwg.mxu0
  %v101 = vmax.f32 %v91, 0.0
  %v102 = vmax.f32 %v93, 0.0
  %v103 = vmax.f32 %v97, 0.0
  %v104 = vmax.f32 %v99, 0.0
  %105 = vst [vmem:[%s2] sm:$0xff] %v101
  %vm106 = vcmask 261120
  %107 = vst.msk [vmem:[%s2 + $0x8] sm:$0xff] %vm106, %v102
  %108 = vst [vmem:[%s2 + $0x10] sm:$0xff] %v103
  %109 = vst.msk [vmem:[%s2 + $0x18] sm:$0xff] %vm106, %v104
  // Predicated region
  $region10: #{stgcn_block_forward.5} parent=0 // pred_check
    _
  $region11: #{stgcn_block_forward.5} parent=0 // pred_check_branch
    %111 = sbr.rel (0) target = $region13
  $region12: #{stgcn_block_forward.5} parent=0 // pred_region
    _
  $region13: #{stgcn_block_forward.5} parent=0 // pred_fallthru
    _
  // Predicated region
  $region14: #{stgcn_block_forward.5} parent=0 // pred_check
    _
  $region15: #{stgcn_block_forward.5} parent=0 // pred_check_branch
    %113 = sbr.rel (0) target = $region17
  $region16: #{stgcn_block_forward.5} parent=0 // pred_region
    _
  $region17: #{stgcn_block_forward.5} parent=0 // pred_fallthru
    _

// kernel: stgcn_block_forward.4
$region0: #{stgcn_block_forward.4}
  #allocation0 [shape = 'u32[]', space=smem, size = 0x4, offset = 0x4, fixed_abs, tag = 'smem constant byte address 0x4 - core index']
  #allocation1 [shape = 'u32[144,128]{1,0:T(1,128)}', space=vmem, size = 0x12000, scoped, tag = 'internal scratch']
  %s0 = inlined_call_operand.vmem [shape: f32[320,12], index: 0, kind: input, shape index: {}]
  %s1 = inlined_call_operand.vmem [shape: f32[12,48], index: 1, kind: input, shape index: {}]
  %s2 = inlined_call_operand.vmem [shape: f32[1,48], index: 2, kind: input, shape index: {}]
  %s3 = inlined_call_operand.vmem [shape: f32[16,8], index: 3, kind: input, shape index: {}]
  %s4 = inlined_call_operand.vmem [shape: f32[320,8], index: 4, kind: output, shape index: {}]
  %s5 = sld [smem:[#allocation0]]
  $region26: #{stgcn_block_forward.4} parent=0
    _
  %s7 = ssub.s32 1, %s5
  %s8 = scalar_select 0, %s7, %s5
  // Predicated region
  $region2: #{stgcn_block_forward.4} parent=0 // pred_check
    _
  $region3: #{stgcn_block_forward.4} parent=0 // pred_check_branch
    %10 = sbr.rel (0) target = $region5
  $region4: #{stgcn_block_forward.4} parent=0 // pred_region
    _
  $region5: #{stgcn_block_forward.4} parent=0 // pred_fallthru
    _
  // Predicated region
  $region6: #{stgcn_block_forward.4} parent=0 // pred_check
    _
  $region7: #{stgcn_block_forward.4} parent=0 // pred_check_branch
    %12 = sbr.rel (0) target = $region9
  $region8: #{stgcn_block_forward.4} parent=0 // pred_region
    _
  $region9: #{stgcn_block_forward.4} parent=0 // pred_fallthru
    _
  // Predicated region
  $region10: #{stgcn_block_forward.4} parent=0 // pred_check
    _
  $region11: #{stgcn_block_forward.4} parent=0 // pred_check_branch
    %14 = sbr.rel (0) target = $region13
  $region12: #{stgcn_block_forward.4} parent=0 // pred_region
    _
  $region13: #{stgcn_block_forward.4} parent=0 // pred_fallthru
    _
  // Predicated region
  $region14: #{stgcn_block_forward.4} parent=0 // pred_check
    _
  $region15: #{stgcn_block_forward.4} parent=0 // pred_check_branch
    %16 = sbr.rel (0) target = $region17
  $region16: #{stgcn_block_forward.4} parent=0 // pred_region
    _
  $region17: #{stgcn_block_forward.4} parent=0 // pred_fallthru
    _
  %v17 = vld [vmem:[%s0] sm:$0xff]
  %v18 = vld [vmem:[%s0 + $0x8] sm:$0xff]
  %v19 = vld [vmem:[%s0 + $0x10] sm:$0xff]
  %v20 = vld [vmem:[%s0 + $0x18] sm:$0xff]
  %v21 = vld [vmem:[%s0 + $0x20] sm:$0xff]
  %v22 = vld [vmem:[%s0 + $0x28] sm:$0xff]
  %v23 = vld [vmem:[%s0 + $0x30] sm:$0xff]
  %v24 = vld [vmem:[%s0 + $0x38] sm:$0xff]
  %v25 = vld [vmem:[%s0 + $0x40] sm:$0xff]
  %v26 = vld [vmem:[%s0 + $0x48] sm:$0xff]
  %v27 = vld [vmem:[%s0 + $0x50] sm:$0xff]
  %v28 = vld [vmem:[%s0 + $0x58] sm:$0xff]
  %v29 = vld [vmem:[%s0 + $0x60] sm:$0xff]
  %v30 = vld [vmem:[%s0 + $0x68] sm:$0xff]
  %v31 = vld [vmem:[%s0 + $0x70] sm:$0xff]
  %v32 = vld [vmem:[%s0 + $0x78] sm:$0xff]
  %v33 = vld [vmem:[%s0 + $0x80] sm:$0xff]
  %v34 = vld [vmem:[%s0 + $0x88] sm:$0xff]
  %v35 = vld [vmem:[%s0 + $0x90] sm:$0xff]
  %v36 = vld [vmem:[%s0 + $0x98] sm:$0xff]
  %v37 = vld [vmem:[%s0 + $0xa0] sm:$0xff]
  %v38 = vld [vmem:[%s0 + $0xa8] sm:$0xff]
  %v39 = vld [vmem:[%s0 + $0xb0] sm:$0xff]
  %v40 = vld [vmem:[%s0 + $0xb8] sm:$0xff]
  %v41 = vld [vmem:[%s0 + $0xc0] sm:$0xff]
  %v42 = vld [vmem:[%s0 + $0xc8] sm:$0xff]
  %v43 = vld [vmem:[%s0 + $0xd0] sm:$0xff]
  %v44 = vld [vmem:[%s0 + $0xd8] sm:$0xff]
  %v45 = vld [vmem:[%s0 + $0xe0] sm:$0xff]
  %v46 = vld [vmem:[%s0 + $0xe8] sm:$0xff]
  %v47 = vld [vmem:[%s0 + $0xf0] sm:$0xff]
  %v48 = vld [vmem:[%s0 + $0xf8] sm:$0xff]
  %v49 = vld [vmem:[%s0 + $0x100] sm:$0xff]
  %v50 = vld [vmem:[%s0 + $0x108] sm:$0xff]
  %v51 = vld [vmem:[%s0 + $0x110] sm:$0xff]
  %v52 = vld [vmem:[%s0 + $0x118] sm:$0xff]
  %v53 = vld [vmem:[%s0 + $0x120] sm:$0xff]
  %v54 = vld [vmem:[%s0 + $0x128] sm:$0xff]
  %v55 = vld [vmem:[%s0 + $0x130] sm:$0xff]
  %v56 = vld [vmem:[%s0 + $0x138] sm:$0xff]
  %v57 = vld [vmem:[%s1] sm:$0xff]
  %v58 = vld [vmem:[%s1 + $0x8] sm:$0xf]
  %v59 = vld [vmem:[%s2] sm:$0x1]
  %v61 = vlaneseq
  %v62 = vshrl.u32 %v61, 7
  %v63 = vsub.s32 0, %v62
  %v64 = vrot.slane %v59, %v63
  %vm66 = vcmask 97280
  %v68 = vsel %vm66, %v17, 0
  %v71 = vsel %vm66, %v18, 0
  %v74 = vsel %vm66, %v19, 0
  %v77 = vsel %vm66, %v20, 0
  %v80 = vsel %vm66, %v21, 0
  %v83 = vsel %vm66, %v22, 0
  %v86 = vsel %vm66, %v23, 0
  %v89 = vsel %vm66, %v24, 0
  %v92 = vsel %vm66, %v25, 0
  %v95 = vsel %vm66, %v26, 0
  %v98 = vsel %vm66, %v27, 0
  %v101 = vsel %vm66, %v28, 0
  %v104 = vsel %vm66, %v29, 0
  %v107 = vsel %vm66, %v30, 0
  %v110 = vsel %vm66, %v31, 0
  %v113 = vsel %vm66, %v32, 0
  %v116 = vsel %vm66, %v33, 0
  %v119 = vsel %vm66, %v34, 0
  %v122 = vsel %vm66, %v35, 0
  %v125 = vsel %vm66, %v36, 0
  %v128 = vsel %vm66, %v37, 0
  %v131 = vsel %vm66, %v38, 0
  %v134 = vsel %vm66, %v39, 0
  %v137 = vsel %vm66, %v40, 0
  %v140 = vsel %vm66, %v41, 0
  %v143 = vsel %vm66, %v42, 0
  %v146 = vsel %vm66, %v43, 0
  %v149 = vsel %vm66, %v44, 0
  %v152 = vsel %vm66, %v45, 0
  %v155 = vsel %vm66, %v46, 0
  %v158 = vsel %vm66, %v47, 0
  %v161 = vsel %vm66, %v48, 0
  %v164 = vsel %vm66, %v49, 0
  %v167 = vsel %vm66, %v50, 0
  %v170 = vsel %vm66, %v51, 0
  %v173 = vsel %vm66, %v52, 0
  %v176 = vsel %vm66, %v53, 0
  %v179 = vsel %vm66, %v54, 0
  %v182 = vsel %vm66, %v55, 0
  %v185 = vsel %vm66, %v56, 0
  %vm187 = vcmask 1043456
  %v189 = vsel %vm187, %v58, 0
  %191 = vmatprep.subr.mxu0 0.0
  %192 = vmatpush1.msra.mxu0 %v57
  %193 = vmatprep.subr.mxu0 0.0
  %194 = vmatpush1.msra.mxu0 %v189
  %195 = vmatprep.subr.mxu0 0.0
  %196 = vmatpush1.msra.mxu0 0.0
  %197 = vmatprep.subr.mxu0 0.0
  %198 = vmatpush1.msra.mxu0 0.0
  %199 = vmatprep.subr.mxu0 0.0
  %200 = vmatpush1.msra.mxu0 0.0
  %201 = vmatprep.subr.mxu0 0.0
  %202 = vmatpush1.msra.mxu0 0.0
  %203 = vmatprep.subr.mxu0 0.0
  %204 = vmatpush1.msra.mxu0 0.0
  %205 = vmatprep.subr.mxu0 0.0
  %206 = vmatpush1.msra.mxu0 0.0
  %207 = vmatprep.subr.mxu0 0.0
  %208 = vmatpush1.msra.mxu0 0.0
  %209 = vmatprep.subr.mxu0 0.0
  %210 = vmatpush1.msra.mxu0 0.0
  %211 = vmatprep.subr.mxu0 0.0
  %212 = vmatpush1.msra.mxu0 0.0
  %213 = vmatprep.subr.mxu0 0.0
  %214 = vmatpush1.msra.mxu0 0.0
  %215 = vmatprep.subr.mxu0 0.0
  %216 = vmatpush1.msra.mxu0 0.0
  %217 = vmatprep.subr.mxu0 0.0
  %218 = vmatpush1.msra.mxu0 0.0
  %219 = vmatprep.subr.mxu0 0.0
  %220 = vmatpush1.msra.mxu0 0.0
  %221 = vmatprep.subr.mxu0 0.0
  %222 = vmatpush1.msra.mxu0 0.0
  %223 = vmatprep.subr.mxu0 0.0
  %224 = vmatpush1.msra.mxu0 0.0
  %225 = vmatprep.subr.mxu0 0.0
  %226 = vmatpush1.msra.mxu0 0.0
  %227 = vmatprep.subr.mxu0 0.0
  %228 = vmatpush1.msra.mxu0 0.0
  %229 = vmatprep.subr.mxu0 0.0
  %230 = vmatpush1.msra.mxu0 0.0
  %231 = vmatprep.subr.mxu0 0.0
  %232 = vmatpush1.msra.mxu0 0.0
  %233 = vmatprep.subr.mxu0 0.0
  %234 = vmatpush1.msra.mxu0 0.0
  %235 = vmatprep.subr.mxu0 0.0
  %236 = vmatpush1.msra.mxu0 0.0
  %237 = vmatprep.subr.mxu0 0.0
  %238 = vmatpush1.msra.mxu0 0.0
  %239 = vmatprep.subr.mxu0 0.0
  %240 = vmatpush1.msra.mxu0 0.0
  %241 = vmatprep.subr.mxu0 0.0
  %242 = vmatpush1.msra.mxu0 0.0
  %243 = vmatprep.subr.mxu0 0.0
  %244 = vmatpush1.msra.mxu0 0.0
  %245 = vmatprep.subr.mxu0 0.0
  %246 = vmatpush1.msra.mxu0 0.0
  %247 = vmatprep.subr.mxu0 0.0
  %248 = vmatpush1.msra.mxu0 0.0
  %249 = vmatprep.subr.mxu0 0.0
  %250 = vmatpush1.msra.mxu0 0.0
  %251 = vmatprep.subr.mxu0 0.0
  %252 = vmatpush1.msra.mxu0 0.0
  %253 = vmatprep.subr.mxu0 0.0
  %254 = vmatpush1.msra.mxu0 0.0
  %255 = vmatprep.mubr.f32.mxu0 0.0
  %256 = vmatmul.mubr.f32.gmra.mrb[0].mxu0 %v68
  %v257 = vpop.f32.mrb[0].mxu0
  %v258 = vadd.f32 %v64, %v257
  %v259 = vpop.f32.mrb[0].mxu0
  %260 = vmatprep.mubr.f32.mxu0 0.0
  %261 = vmatmul.mubr.f32.gmra.mrb[0].mxu0 %v71
  %v262 = vpop.f32.mrb[0].mxu0
  %v263 = vadd.f32 %v64, %v262
  %v264 = vpop.f32.mrb[0].mxu0
  %265 = vmatprep.mubr.f32.mxu0 0.0
  %266 = vmatmul.mubr.f32.gmra.mrb[0].mxu0 %v74
  %v267 = vpop.f32.mrb[0].mxu0
  %v268 = vadd.f32 %v64, %v267
  %v269 = vpop.f32.mrb[0].mxu0
  %270 = vmatprep.mubr.f32.mxu0 0.0
  %271 = vmatmul.mubr.f32.gmra.mrb[0].mxu0 %v77
  %v272 = vpop.f32.mrb[0].mxu0
  %v273 = vadd.f32 %v64, %v272
  %v274 = vpop.f32.mrb[0].mxu0
  %275 = vmatprep.mubr.f32.mxu0 0.0
  %276 = vmatmul.mubr.f32.gmra.mrb[0].mxu0 %v80
  %v277 = vpop.f32.mrb[0].mxu0
  %v278 = vadd.f32 %v64, %v277
  %v279 = vpop.f32.mrb[0].mxu0
  %280 = vmatprep.mubr.f32.mxu0 0.0
  %281 = vmatmul.mubr.f32.gmra.mrb[0].mxu0 %v83
  %v282 = vpop.f32.mrb[0].mxu0
  %v283 = vadd.f32 %v64, %v282
  %v284 = vpop.f32.mrb[0].mxu0
  %285 = vmatprep.mubr.f32.mxu0 0.0
  %286 = vmatmul.mubr.f32.gmra.mrb[0].mxu0 %v86
  %v287 = vpop.f32.mrb[0].mxu0
  %v288 = vadd.f32 %v64, %v287
  %v289 = vpop.f32.mrb[0].mxu0
  %290 = vmatprep.mubr.f32.mxu0 0.0
  %291 = vmatmul.mubr.f32.gmra.mrb[0].mxu0 %v89
  %v292 = vpop.f32.mrb[0].mxu0
  %v293 = vadd.f32 %v64, %v292
  %v294 = vpop.f32.mrb[0].mxu0
  %295 = vmatprep.mubr.f32.mxu0 0.0
  %296 = vmatmul.mubr.f32.gmra.mrb[0].mxu0 %v92
  %v297 = vpop.f32.mrb[0].mxu0
  %v298 = vadd.f32 %v64, %v297
  %v299 = vpop.f32.mrb[0].mxu0
  %300 = vmatprep.mubr.f32.mxu0 0.0
  %301 = vmatmul.mubr.f32.gmra.mrb[0].mxu0 %v95
  %v302 = vpop.f32.mrb[0].mxu0
  %v303 = vadd.f32 %v64, %v302
  %v304 = vpop.f32.mrb[0].mxu0
  %305 = vmatprep.mubr.f32.mxu0 0.0
  %306 = vmatmul.mubr.f32.gmra.mrb[0].mxu0 %v98
  %v307 = vpop.f32.mrb[0].mxu0
  %v308 = vadd.f32 %v64, %v307
  %v309 = vpop.f32.mrb[0].mxu0
  %310 = vmatprep.mubr.f32.mxu0 0.0
  %311 = vmatmul.mubr.f32.gmra.mrb[0].mxu0 %v101
  %v312 = vpop.f32.mrb[0].mxu0
  %v313 = vadd.f32 %v64, %v312
  %v314 = vpop.f32.mrb[0].mxu0
  %315 = vmatprep.mubr.f32.mxu0 0.0
  %316 = vmatmul.mubr.f32.gmra.mrb[0].mxu0 %v104
  %v317 = vpop.f32.mrb[0].mxu0
  %v318 = vadd.f32 %v64, %v317
  %v319 = vpop.f32.mrb[0].mxu0
  %320 = vmatprep.mubr.f32.mxu0 0.0
  %321 = vmatmul.mubr.f32.gmra.mrb[0].mxu0 %v107
  %v322 = vpop.f32.mrb[0].mxu0
  %v323 = vadd.f32 %v64, %v322
  %v324 = vpop.f32.mrb[0].mxu0
  %325 = vmatprep.mubr.f32.mxu0 0.0
  %326 = vmatmul.mubr.f32.gmra.mrb[0].mxu0 %v110
  %v327 = vpop.f32.mrb[0].mxu0
  %v328 = vadd.f32 %v64, %v327
  %v329 = vpop.f32.mrb[0].mxu0
  %330 = vmatprep.mubr.f32.mxu0 0.0
  %331 = vmatmul.mubr.f32.gmra.mrb[0].mxu0 %v113
  %v332 = vpop.f32.mrb[0].mxu0
  %v333 = vadd.f32 %v64, %v332
  %v334 = vpop.f32.mrb[0].mxu0
  %335 = vmatprep.mubr.f32.mxu0 0.0
  %336 = vmatmul.mubr.f32.gmra.mrb[0].mxu0 %v116
  %v337 = vpop.f32.mrb[0].mxu0
  %v338 = vadd.f32 %v64, %v337
  %v339 = vpop.f32.mrb[0].mxu0
  %340 = vmatprep.mubr.f32.mxu0 0.0
  %341 = vmatmul.mubr.f32.gmra.mrb[0].mxu0 %v119
  %v342 = vpop.f32.mrb[0].mxu0
  %v343 = vadd.f32 %v64, %v342
  %v344 = vpop.f32.mrb[0].mxu0
  %345 = vmatprep.mubr.f32.mxu0 0.0
  %346 = vmatmul.mubr.f32.gmra.mrb[0].mxu0 %v122
  %v347 = vpop.f32.mrb[0].mxu0
  %v348 = vadd.f32 %v64, %v347
  %v349 = vpop.f32.mrb[0].mxu0
  %350 = vmatprep.mubr.f32.mxu0 0.0
  %351 = vmatmul.mubr.f32.gmra.mrb[0].mxu0 %v125
  %v352 = vpop.f32.mrb[0].mxu0
  %v353 = vadd.f32 %v64, %v352
  %v354 = vpop.f32.mrb[0].mxu0
  %355 = vmatprep.mubr.f32.mxu0 0.0
  %356 = vmatmul.mubr.f32.gmra.mrb[0].mxu0 %v128
  %v357 = vpop.f32.mrb[0].mxu0
  %v358 = vadd.f32 %v64, %v357
  %v359 = vpop.f32.mrb[0].mxu0
  %360 = vmatprep.mubr.f32.mxu0 0.0
  %361 = vmatmul.mubr.f32.gmra.mrb[0].mxu0 %v131
  %v362 = vpop.f32.mrb[0].mxu0
  %v363 = vadd.f32 %v64, %v362
  %v364 = vpop.f32.mrb[0].mxu0
  %365 = vmatprep.mubr.f32.mxu0 0.0
  %366 = vmatmul.mubr.f32.gmra.mrb[0].mxu0 %v134
  %v367 = vpop.f32.mrb[0].mxu0
  %v368 = vadd.f32 %v64, %v367
  %v369 = vpop.f32.mrb[0].mxu0
  %370 = vmatprep.mubr.f32.mxu0 0.0
  %371 = vmatmul.mubr.f32.gmra.mrb[0].mxu0 %v137
  %v372 = vpop.f32.mrb[0].mxu0
  %v373 = vadd.f32 %v64, %v372
  %v374 = vpop.f32.mrb[0].mxu0
  %375 = vmatprep.mubr.f32.mxu0 0.0
  %376 = vmatmul.mubr.f32.gmra.mrb[0].mxu0 %v140
  %v377 = vpop.f32.mrb[0].mxu0
  %v378 = vadd.f32 %v64, %v377
  %v379 = vpop.f32.mrb[0].mxu0
  %380 = vmatprep.mubr.f32.mxu0 0.0
  %381 = vmatmul.mubr.f32.gmra.mrb[0].mxu0 %v143
  %v382 = vpop.f32.mrb[0].mxu0
  %v383 = vadd.f32 %v64, %v382
  %v384 = vpop.f32.mrb[0].mxu0
  %385 = vmatprep.mubr.f32.mxu0 0.0
  %386 = vmatmul.mubr.f32.gmra.mrb[0].mxu0 %v146
  %v387 = vpop.f32.mrb[0].mxu0
  %v388 = vadd.f32 %v64, %v387
  %v389 = vpop.f32.mrb[0].mxu0
  %390 = vmatprep.mubr.f32.mxu0 0.0
  %391 = vmatmul.mubr.f32.gmra.mrb[0].mxu0 %v149
  %v392 = vpop.f32.mrb[0].mxu0
  %v393 = vadd.f32 %v64, %v392
  %v394 = vpop.f32.mrb[0].mxu0
  %395 = vmatprep.mubr.f32.mxu0 0.0
  %396 = vmatmul.mubr.f32.gmra.mrb[0].mxu0 %v152
  %v397 = vpop.f32.mrb[0].mxu0
  %v398 = vadd.f32 %v64, %v397
  %v399 = vpop.f32.mrb[0].mxu0
  %400 = vmatprep.mubr.f32.mxu0 0.0
  %401 = vmatmul.mubr.f32.gmra.mrb[0].mxu0 %v155
  %v402 = vpop.f32.mrb[0].mxu0
  %v403 = vadd.f32 %v64, %v402
  %v404 = vpop.f32.mrb[0].mxu0
  %405 = vmatprep.mubr.f32.mxu0 0.0
  %406 = vmatmul.mubr.f32.gmra.mrb[0].mxu0 %v158
  %v407 = vpop.f32.mrb[0].mxu0
  %v408 = vadd.f32 %v64, %v407
  %v409 = vpop.f32.mrb[0].mxu0
  %410 = vmatprep.mubr.f32.mxu0 0.0
  %411 = vmatmul.mubr.f32.gmra.mrb[0].mxu0 %v161
  %v412 = vpop.f32.mrb[0].mxu0
  %v413 = vadd.f32 %v64, %v412
  %v414 = vpop.f32.mrb[0].mxu0
  %415 = vmatprep.mubr.f32.mxu0 0.0
  %416 = vmatmul.mubr.f32.gmra.mrb[0].mxu0 %v164
  %v417 = vpop.f32.mrb[0].mxu0
  %v418 = vadd.f32 %v64, %v417
  %v419 = vpop.f32.mrb[0].mxu0
  %420 = vmatprep.mubr.f32.mxu0 0.0
  %421 = vmatmul.mubr.f32.gmra.mrb[0].mxu0 %v167
  %v422 = vpop.f32.mrb[0].mxu0
  %v423 = vadd.f32 %v64, %v422
  %v424 = vpop.f32.mrb[0].mxu0
  %425 = vmatprep.mubr.f32.mxu0 0.0
  %426 = vmatmul.mubr.f32.gmra.mrb[0].mxu0 %v170
  %v427 = vpop.f32.mrb[0].mxu0
  %v428 = vadd.f32 %v64, %v427
  %v429 = vpop.f32.mrb[0].mxu0
  %430 = vmatprep.mubr.f32.mxu0 0.0
  %431 = vmatmul.mubr.f32.gmra.mrb[0].mxu0 %v173
  %v432 = vpop.f32.mrb[0].mxu0
  %v433 = vadd.f32 %v64, %v432
  %v434 = vpop.f32.mrb[0].mxu0
  %435 = vmatprep.mubr.f32.mxu0 0.0
  %436 = vmatmul.mubr.f32.gmra.mrb[0].mxu0 %v176
  %v437 = vpop.f32.mrb[0].mxu0
  %v438 = vadd.f32 %v64, %v437
  %v439 = vpop.f32.mrb[0].mxu0
  %440 = vmatprep.mubr.f32.mxu0 0.0
  %441 = vmatmul.mubr.f32.gmra.mrb[0].mxu0 %v179
  %v442 = vpop.f32.mrb[0].mxu0
  %v443 = vadd.f32 %v64, %v442
  %v444 = vpop.f32.mrb[0].mxu0
  %445 = vmatprep.mubr.f32.mxu0 0.0
  %446 = vmatmul.mubr.f32.gmra.mrb[0].mxu0 %v182
  %v447 = vpop.f32.mrb[0].mxu0
  %v448 = vadd.f32 %v64, %v447
  %v449 = vpop.f32.mrb[0].mxu0
  %450 = vmatprep.mubr.f32.mxu0 0.0
  %451 = vmatmul.mubr.f32.gmra.mrb[0].mxu0 %v185
  %v452 = vpop.f32.mrb[0].mxu0
  %v453 = vadd.f32 %v64, %v452
  %v454 = vpop.f32.mrb[0].mxu0
  %455 = vdwg.mxu0
  %v456 = vxor.u32 %v258, 2147483648
  %v457 = vxor.u32 %v263, 2147483648
  %v458 = vxor.u32 %v268, 2147483648
  %v459 = vxor.u32 %v273, 2147483648
  %v460 = vxor.u32 %v278, 2147483648
  %v461 = vxor.u32 %v283, 2147483648
  %v462 = vxor.u32 %v288, 2147483648
  %v463 = vxor.u32 %v293, 2147483648
  %v464 = vxor.u32 %v298, 2147483648
  %v465 = vxor.u32 %v303, 2147483648
  %v466 = vxor.u32 %v308, 2147483648
  %v467 = vxor.u32 %v313, 2147483648
  %v468 = vxor.u32 %v318, 2147483648
  %v469 = vxor.u32 %v323, 2147483648
  %v470 = vxor.u32 %v328, 2147483648
  %v471 = vxor.u32 %v333, 2147483648
  %v472 = vxor.u32 %v338, 2147483648
  %v473 = vxor.u32 %v343, 2147483648
  %v474 = vxor.u32 %v348, 2147483648
  %v475 = vxor.u32 %v353, 2147483648
  %v476 = vxor.u32 %v358, 2147483648
  %v477 = vxor.u32 %v363, 2147483648
  %v478 = vxor.u32 %v368, 2147483648
  %v479 = vxor.u32 %v373, 2147483648
  %v480 = vxor.u32 %v378, 2147483648
  %v481 = vxor.u32 %v383, 2147483648
  %v482 = vxor.u32 %v388, 2147483648
  %v483 = vxor.u32 %v393, 2147483648
  %v484 = vxor.u32 %v398, 2147483648
  %v485 = vxor.u32 %v403, 2147483648
  %v486 = vxor.u32 %v408, 2147483648
  %v487 = vxor.u32 %v413, 2147483648
  %v488 = vxor.u32 %v418, 2147483648
  %v489 = vxor.u32 %v423, 2147483648
  %v490 = vxor.u32 %v428, 2147483648
  %v491 = vxor.u32 %v433, 2147483648
  %v492 = vxor.u32 %v438, 2147483648
  %v493 = vxor.u32 %v443, 2147483648
  %v494 = vxor.u32 %v448, 2147483648
  %v495 = vxor.u32 %v453, 2147483648
  %v496 = vmul.f32 %v456, 1.442695
  %v497 = vpow.pop %v496
  %v498 = vmul.f32 %v457, 1.442695
  %v499 = vpow.pop %v498
  %v500 = vmul.f32 %v458, 1.442695
  %v501 = vpow.pop %v500
  %v502 = vmul.f32 %v459, 1.442695
  %v503 = vpow.pop %v502
  %v504 = vmul.f32 %v460, 1.442695
  %v505 = vpow.pop %v504
  %v506 = vmul.f32 %v461, 1.442695
  %v507 = vpow.pop %v506
  %v508 = vmul.f32 %v462, 1.442695
  %v509 = vpow.pop %v508
  %v510 = vmul.f32 %v463, 1.442695
  %v511 = vpow.pop %v510
  %v512 = vmul.f32 %v464, 1.442695
  %v513 = vpow.pop %v512
  %v514 = vmul.f32 %v465, 1.442695
  %v515 = vpow.pop %v514
  %v516 = vmul.f32 %v466, 1.442695
  %v517 = vpow.pop %v516
  %v518 = vmul.f32 %v467, 1.442695
  %v519 = vpow.pop %v518
  %v520 = vmul.f32 %v468, 1.442695
  %v521 = vpow.pop %v520
  %v522 = vmul.f32 %v469, 1.442695
  %v523 = vpow.pop %v522
  %v524 = vmul.f32 %v470, 1.442695
  %v525 = vpow.pop %v524
  %v526 = vmul.f32 %v471, 1.442695
  %v527 = vpow.pop %v526
  %v528 = vmul.f32 %v472, 1.442695
  %v529 = vpow.pop %v528
  %v530 = vmul.f32 %v473, 1.442695
  %v531 = vpow.pop %v530
  %v532 = vmul.f32 %v474, 1.442695
  %v533 = vpow.pop %v532
  %v534 = vmul.f32 %v475, 1.442695
  %v535 = vpow.pop %v534
  %v536 = vmul.f32 %v476, 1.442695
  %v537 = vpow.pop %v536
  %v538 = vmul.f32 %v477, 1.442695
  %v539 = vpow.pop %v538
  %v540 = vmul.f32 %v478, 1.442695
  %v541 = vpow.pop %v540
  %v542 = vmul.f32 %v479, 1.442695
  %v543 = vpow.pop %v542
  %v544 = vmul.f32 %v480, 1.442695
  %v545 = vpow.pop %v544
  %v546 = vmul.f32 %v481, 1.442695
  %v547 = vpow.pop %v546
  %v548 = vmul.f32 %v482, 1.442695
  %v549 = vpow.pop %v548
  %v550 = vmul.f32 %v483, 1.442695
  %v551 = vpow.pop %v550
  %v552 = vmul.f32 %v484, 1.442695
  %v553 = vpow.pop %v552
  %v554 = vmul.f32 %v485, 1.442695
  %v555 = vpow.pop %v554
  %v556 = vmul.f32 %v486, 1.442695
  %v557 = vpow.pop %v556
  %v558 = vmul.f32 %v487, 1.442695
  %v559 = vpow.pop %v558
  %v560 = vmul.f32 %v488, 1.442695
  %v561 = vpow.pop %v560
  %v562 = vmul.f32 %v489, 1.442695
  %v563 = vpow.pop %v562
  %v564 = vmul.f32 %v490, 1.442695
  %v565 = vpow.pop %v564
  %v566 = vmul.f32 %v491, 1.442695
  %v567 = vpow.pop %v566
  %v568 = vmul.f32 %v492, 1.442695
  %v569 = vpow.pop %v568
  %v570 = vmul.f32 %v493, 1.442695
  %v571 = vpow.pop %v570
  %v572 = vmul.f32 %v494, 1.442695
  %v573 = vpow.pop %v572
  %v574 = vmul.f32 %v495, 1.442695
  %v575 = vpow.pop %v574
  %v576 = vadd.f32 %v497, 1.0
  %v577 = vadd.f32 %v499, 1.0
  %v578 = vadd.f32 %v501, 1.0
  %v579 = vadd.f32 %v503, 1.0
  %v580 = vadd.f32 %v505, 1.0
  %v581 = vadd.f32 %v507, 1.0
  %v582 = vadd.f32 %v509, 1.0
  %v583 = vadd.f32 %v511, 1.0
  %v584 = vadd.f32 %v513, 1.0
  %v585 = vadd.f32 %v515, 1.0
  %v586 = vadd.f32 %v517, 1.0
  %v587 = vadd.f32 %v519, 1.0
  %v588 = vadd.f32 %v521, 1.0
  %v589 = vadd.f32 %v523, 1.0
  %v590 = vadd.f32 %v525, 1.0
  %v591 = vadd.f32 %v527, 1.0
  %v592 = vadd.f32 %v529, 1.0
  %v593 = vadd.f32 %v531, 1.0
  %v594 = vadd.f32 %v533, 1.0
  %v595 = vadd.f32 %v535, 1.0
  %v596 = vadd.f32 %v537, 1.0
  %v597 = vadd.f32 %v539, 1.0
  %v598 = vadd.f32 %v541, 1.0
  %v599 = vadd.f32 %v543, 1.0
  %v600 = vadd.f32 %v545, 1.0
  %v601 = vadd.f32 %v547, 1.0
  %v602 = vadd.f32 %v549, 1.0
  %v603 = vadd.f32 %v551, 1.0
  %v604 = vadd.f32 %v553, 1.0
  %v605 = vadd.f32 %v555, 1.0
  %v606 = vadd.f32 %v557, 1.0
  %v607 = vadd.f32 %v559, 1.0
  %v608 = vadd.f32 %v561, 1.0
  %v609 = vadd.f32 %v563, 1.0
  %v610 = vadd.f32 %v565, 1.0
  %v611 = vadd.f32 %v567, 1.0
  %v612 = vadd.f32 %v569, 1.0
  %v613 = vadd.f32 %v571, 1.0
  %v614 = vadd.f32 %v573, 1.0
  %v615 = vadd.f32 %v575, 1.0
  %v616 = vrcp.pop %v576
  %v617 = vmul.f32 1.0, %v616
  %v618 = vrcp.pop %v577
  %v619 = vmul.f32 1.0, %v618
  %v620 = vrcp.pop %v578
  %v621 = vmul.f32 1.0, %v620
  %v622 = vrcp.pop %v579
  %v623 = vmul.f32 1.0, %v622
  %v624 = vrcp.pop %v580
  %v625 = vmul.f32 1.0, %v624
  %v626 = vrcp.pop %v581
  %v627 = vmul.f32 1.0, %v626
  %v628 = vrcp.pop %v582
  %v629 = vmul.f32 1.0, %v628
  %v630 = vrcp.pop %v583
  %v631 = vmul.f32 1.0, %v630
  %v632 = vrcp.pop %v584
  %v633 = vmul.f32 1.0, %v632
  %v634 = vrcp.pop %v585
  %v635 = vmul.f32 1.0, %v634
  %v636 = vrcp.pop %v586
  %v637 = vmul.f32 1.0, %v636
  %v638 = vrcp.pop %v587
  %v639 = vmul.f32 1.0, %v638
  %v640 = vrcp.pop %v588
  %v641 = vmul.f32 1.0, %v640
  %v642 = vrcp.pop %v589
  %v643 = vmul.f32 1.0, %v642
  %v644 = vrcp.pop %v590
  %v645 = vmul.f32 1.0, %v644
  %v646 = vrcp.pop %v591
  %v647 = vmul.f32 1.0, %v646
  %v648 = vrcp.pop %v592
  %v649 = vmul.f32 1.0, %v648
  %v650 = vrcp.pop %v593
  %v651 = vmul.f32 1.0, %v650
  %v652 = vrcp.pop %v594
  %v653 = vmul.f32 1.0, %v652
  %v654 = vrcp.pop %v595
  %v655 = vmul.f32 1.0, %v654
  %v656 = vrcp.pop %v596
  %v657 = vmul.f32 1.0, %v656
  %v658 = vrcp.pop %v597
  %v659 = vmul.f32 1.0, %v658
  %v660 = vrcp.pop %v598
  %v661 = vmul.f32 1.0, %v660
  %v662 = vrcp.pop %v599
  %v663 = vmul.f32 1.0, %v662
  %v664 = vrcp.pop %v600
  %v665 = vmul.f32 1.0, %v664
  %v666 = vrcp.pop %v601
  %v667 = vmul.f32 1.0, %v666
  %v668 = vrcp.pop %v602
  %v669 = vmul.f32 1.0, %v668
  %v670 = vrcp.pop %v603
  %v671 = vmul.f32 1.0, %v670
  %v672 = vrcp.pop %v604
  %v673 = vmul.f32 1.0, %v672
  %v674 = vrcp.pop %v605
  %v675 = vmul.f32 1.0, %v674
  %v676 = vrcp.pop %v606
  %v677 = vmul.f32 1.0, %v676
  %v678 = vrcp.pop %v607
  %v679 = vmul.f32 1.0, %v678
  %v680 = vrcp.pop %v608
  %v681 = vmul.f32 1.0, %v680
  %v682 = vrcp.pop %v609
  %v683 = vmul.f32 1.0, %v682
  %v684 = vrcp.pop %v610
  %v685 = vmul.f32 1.0, %v684
  %v686 = vrcp.pop %v611
  %v687 = vmul.f32 1.0, %v686
  %v688 = vrcp.pop %v612
  %v689 = vmul.f32 1.0, %v688
  %v690 = vrcp.pop %v613
  %v691 = vmul.f32 1.0, %v690
  %v692 = vrcp.pop %v614
  %v693 = vmul.f32 1.0, %v692
  %v694 = vrcp.pop %v615
  %v695 = vmul.f32 1.0, %v694
  %736 = vrot.lane.b32.xlu0 %v617, 112
  %v737 = vpop.permute.xlu0 %736
  %738 = vrot.lane.b32.xlu0 %v619, 112
  %v739 = vpop.permute.xlu0 %738
  %740 = vrot.lane.b32.xlu0 %v621, 112
  %v741 = vpop.permute.xlu0 %740
  %742 = vrot.lane.b32.xlu0 %v623, 112
  %v743 = vpop.permute.xlu0 %742
  %744 = vrot.lane.b32.xlu0 %v625, 112
  %v745 = vpop.permute.xlu0 %744
  %746 = vrot.lane.b32.xlu0 %v627, 112
  %v747 = vpop.permute.xlu0 %746
  %748 = vrot.lane.b32.xlu0 %v629, 112
  %v749 = vpop.permute.xlu0 %748
  %750 = vrot.lane.b32.xlu0 %v631, 112
  %v751 = vpop.permute.xlu0 %750
  %752 = vrot.lane.b32.xlu0 %v633, 112
  %v753 = vpop.permute.xlu0 %752
  %754 = vrot.lane.b32.xlu0 %v635, 112
  %v755 = vpop.permute.xlu0 %754
  %756 = vrot.lane.b32.xlu0 %v637, 112
  %v757 = vpop.permute.xlu0 %756
  %758 = vrot.lane.b32.xlu0 %v639, 112
  %v759 = vpop.permute.xlu0 %758
  %760 = vrot.lane.b32.xlu0 %v641, 112
  %v761 = vpop.permute.xlu0 %760
  %762 = vrot.lane.b32.xlu0 %v643, 112
  %v763 = vpop.permute.xlu0 %762
  %764 = vrot.lane.b32.xlu0 %v645, 112
  %v765 = vpop.permute.xlu0 %764
  %766 = vrot.lane.b32.xlu0 %v647, 112
  %v767 = vpop.permute.xlu0 %766
  %768 = vrot.lane.b32.xlu0 %v649, 112
  %v769 = vpop.permute.xlu0 %768
  %770 = vrot.lane.b32.xlu0 %v651, 112
  %v771 = vpop.permute.xlu0 %770
  %772 = vrot.lane.b32.xlu0 %v653, 112
  %v773 = vpop.permute.xlu0 %772
  %774 = vrot.lane.b32.xlu0 %v655, 112
  %v775 = vpop.permute.xlu0 %774
  %776 = vrot.lane.b32.xlu0 %v657, 112
  %v777 = vpop.permute.xlu0 %776
  %778 = vrot.lane.b32.xlu0 %v659, 112
  %v779 = vpop.permute.xlu0 %778
  %780 = vrot.lane.b32.xlu0 %v661, 112
  %v781 = vpop.permute.xlu0 %780
  %782 = vrot.lane.b32.xlu0 %v663, 112
  %v783 = vpop.permute.xlu0 %782
  %784 = vrot.lane.b32.xlu0 %v665, 112
  %v785 = vpop.permute.xlu0 %784
  %786 = vrot.lane.b32.xlu0 %v667, 112
  %v787 = vpop.permute.xlu0 %786
  %788 = vrot.lane.b32.xlu0 %v669, 112
  %v789 = vpop.permute.xlu0 %788
  %790 = vrot.lane.b32.xlu0 %v671, 112
  %v791 = vpop.permute.xlu0 %790
  %792 = vrot.lane.b32.xlu0 %v673, 112
  %v793 = vpop.permute.xlu0 %792
  %794 = vrot.lane.b32.xlu0 %v675, 112
  %v795 = vpop.permute.xlu0 %794
  %796 = vrot.lane.b32.xlu0 %v677, 112
  %v797 = vpop.permute.xlu0 %796
  %798 = vrot.lane.b32.xlu0 %v679, 112
  %v799 = vpop.permute.xlu0 %798
  %800 = vrot.lane.b32.xlu0 %v681, 112
  %v801 = vpop.permute.xlu0 %800
  %802 = vrot.lane.b32.xlu0 %v683, 112
  %v803 = vpop.permute.xlu0 %802
  %804 = vrot.lane.b32.xlu0 %v685, 112
  %v805 = vpop.permute.xlu0 %804
  %806 = vrot.lane.b32.xlu0 %v687, 112
  %v807 = vpop.permute.xlu0 %806
  %808 = vrot.lane.b32.xlu0 %v689, 112
  %v809 = vpop.permute.xlu0 %808
  %810 = vrot.lane.b32.xlu0 %v691, 112
  %v811 = vpop.permute.xlu0 %810
  %812 = vrot.lane.b32.xlu0 %v693, 112
  %v813 = vpop.permute.xlu0 %812
  %814 = vrot.lane.b32.xlu0 %v695, 112
  %v815 = vpop.permute.xlu0 %814
  %v856 = vadd.f32 %v258, %v737
  %v857 = vadd.f32 %v263, %v739
  %v858 = vadd.f32 %v268, %v741
  %v859 = vadd.f32 %v273, %v743
  %v860 = vadd.f32 %v278, %v745
  %v861 = vadd.f32 %v283, %v747
  %v862 = vadd.f32 %v288, %v749
  %v863 = vadd.f32 %v293, %v751
  %v864 = vadd.f32 %v298, %v753
  %v865 = vadd.f32 %v303, %v755
  %v866 = vadd.f32 %v308, %v757
  %v867 = vadd.f32 %v313, %v759
  %v868 = vadd.f32 %v318, %v761
  %v869 = vadd.f32 %v323, %v763
  %v870 = vadd.f32 %v328, %v765
  %v871 = vadd.f32 %v333, %v767
  %v872 = vadd.f32 %v338, %v769
  %v873 = vadd.f32 %v343, %v771
  %v874 = vadd.f32 %v348, %v773
  %v875 = vadd.f32 %v353, %v775
  %v876 = vadd.f32 %v358, %v777
  %v877 = vadd.f32 %v363, %v779
  %v878 = vadd.f32 %v368, %v781
  %v879 = vadd.f32 %v373, %v783
  %v880 = vadd.f32 %v378, %v785
  %v881 = vadd.f32 %v383, %v787
  %v882 = vadd.f32 %v388, %v789
  %v883 = vadd.f32 %v393, %v791
  %v884 = vadd.f32 %v398, %v793
  %v885 = vadd.f32 %v403, %v795
  %v886 = vadd.f32 %v408, %v797
  %v887 = vadd.f32 %v413, %v799
  %v888 = vadd.f32 %v418, %v801
  %v889 = vadd.f32 %v423, %v803
  %v890 = vadd.f32 %v428, %v805
  %v891 = vadd.f32 %v433, %v807
  %v892 = vadd.f32 %v438, %v809
  %v893 = vadd.f32 %v443, %v811
  %v894 = vadd.f32 %v448, %v813
  %v895 = vadd.f32 %v453, %v815
  %936 = vrot.lane.b32.xlu0 %v258, 96
  %v937 = vpop.permute.xlu0 %936
  %938 = vrot.lane.b32.xlu0 %v263, 96
  %v939 = vpop.permute.xlu0 %938
  %940 = vrot.lane.b32.xlu0 %v268, 96
  %v941 = vpop.permute.xlu0 %940
  %942 = vrot.lane.b32.xlu0 %v273, 96
  %v943 = vpop.permute.xlu0 %942
  %944 = vrot.lane.b32.xlu0 %v278, 96
  %v945 = vpop.permute.xlu0 %944
  %946 = vrot.lane.b32.xlu0 %v283, 96
  %v947 = vpop.permute.xlu0 %946
  %948 = vrot.lane.b32.xlu0 %v288, 96
  %v949 = vpop.permute.xlu0 %948
  %950 = vrot.lane.b32.xlu0 %v293, 96
  %v951 = vpop.permute.xlu0 %950
  %952 = vrot.lane.b32.xlu0 %v298, 96
  %v953 = vpop.permute.xlu0 %952
  %954 = vrot.lane.b32.xlu0 %v303, 96
  %v955 = vpop.permute.xlu0 %954
  %956 = vrot.lane.b32.xlu0 %v308, 96
  %v957 = vpop.permute.xlu0 %956
  %958 = vrot.lane.b32.xlu0 %v313, 96
  %v959 = vpop.permute.xlu0 %958
  %960 = vrot.lane.b32.xlu0 %v318, 96
  %v961 = vpop.permute.xlu0 %960
  %962 = vrot.lane.b32.xlu0 %v323, 96
  %v963 = vpop.permute.xlu0 %962
  %964 = vrot.lane.b32.xlu0 %v328, 96
  %v965 = vpop.permute.xlu0 %964
  %966 = vrot.lane.b32.xlu0 %v333, 96
  %v967 = vpop.permute.xlu0 %966
  %968 = vrot.lane.b32.xlu0 %v338, 96
  %v969 = vpop.permute.xlu0 %968
  %970 = vrot.lane.b32.xlu0 %v343, 96
  %v971 = vpop.permute.xlu0 %970
  %972 = vrot.lane.b32.xlu0 %v348, 96
  %v973 = vpop.permute.xlu0 %972
  %974 = vrot.lane.b32.xlu0 %v353, 96
  %v975 = vpop.permute.xlu0 %974
  %976 = vrot.lane.b32.xlu0 %v358, 96
  %v977 = vpop.permute.xlu0 %976
  %978 = vrot.lane.b32.xlu0 %v363, 96
  %v979 = vpop.permute.xlu0 %978
  %980 = vrot.lane.b32.xlu0 %v368, 96
  %v981 = vpop.permute.xlu0 %980
  %982 = vrot.lane.b32.xlu0 %v373, 96
  %v983 = vpop.permute.xlu0 %982
  %984 = vrot.lane.b32.xlu0 %v378, 96
  %v985 = vpop.permute.xlu0 %984
  %986 = vrot.lane.b32.xlu0 %v383, 96
  %v987 = vpop.permute.xlu0 %986
  %988 = vrot.lane.b32.xlu0 %v388, 96
  %v989 = vpop.permute.xlu0 %988
  %990 = vrot.lane.b32.xlu0 %v393, 96
  %v991 = vpop.permute.xlu0 %990
  %992 = vrot.lane.b32.xlu0 %v398, 96
  %v993 = vpop.permute.xlu0 %992
  %994 = vrot.lane.b32.xlu0 %v403, 96
  %v995 = vpop.permute.xlu0 %994
  %996 = vrot.lane.b32.xlu0 %v408, 96
  %v997 = vpop.permute.xlu0 %996
  %998 = vrot.lane.b32.xlu0 %v413, 96
  %v999 = vpop.permute.xlu0 %998
  %1000 = vrot.lane.b32.xlu0 %v418, 96
  %v1001 = vpop.permute.xlu0 %1000
  %1002 = vrot.lane.b32.xlu0 %v423, 96
  %v1003 = vpop.permute.xlu0 %1002
  %1004 = vrot.lane.b32.xlu0 %v428, 96
  %v1005 = vpop.permute.xlu0 %1004
  %1006 = vrot.lane.b32.xlu0 %v433, 96
  %v1007 = vpop.permute.xlu0 %1006
  %1008 = vrot.lane.b32.xlu0 %v438, 96
  %v1009 = vpop.permute.xlu0 %1008
  %1010 = vrot.lane.b32.xlu0 %v443, 96
  %v1011 = vpop.permute.xlu0 %1010
  %1012 = vrot.lane.b32.xlu0 %v448, 96
  %v1013 = vpop.permute.xlu0 %1012
  %1014 = vrot.lane.b32.xlu0 %v453, 96
  %v1015 = vpop.permute.xlu0 %1014
  %v1056 = vadd.f32 %v856, %v937
  %v1057 = vadd.f32 %v857, %v939
  %v1058 = vadd.f32 %v858, %v941
  %v1059 = vadd.f32 %v859, %v943
  %v1060 = vadd.f32 %v860, %v945
  %v1061 = vadd.f32 %v861, %v947
  %v1062 = vadd.f32 %v862, %v949
  %v1063 = vadd.f32 %v863, %v951
  %v1064 = vadd.f32 %v864, %v953
  %v1065 = vadd.f32 %v865, %v955
  %v1066 = vadd.f32 %v866, %v957
  %v1067 = vadd.f32 %v867, %v959
  %v1068 = vadd.f32 %v868, %v961
  %v1069 = vadd.f32 %v869, %v963
  %v1070 = vadd.f32 %v870, %v965
  %v1071 = vadd.f32 %v871, %v967
  %v1072 = vadd.f32 %v872, %v969
  %v1073 = vadd.f32 %v873, %v971
  %v1074 = vadd.f32 %v874, %v973
  %v1075 = vadd.f32 %v875, %v975
  %v1076 = vadd.f32 %v876, %v977
  %v1077 = vadd.f32 %v877, %v979
  %v1078 = vadd.f32 %v878, %v981
  %v1079 = vadd.f32 %v879, %v983
  %v1080 = vadd.f32 %v880, %v985
  %v1081 = vadd.f32 %v881, %v987
  %v1082 = vadd.f32 %v882, %v989
  %v1083 = vadd.f32 %v883, %v991
  %v1084 = vadd.f32 %v884, %v993
  %v1085 = vadd.f32 %v885, %v995
  %v1086 = vadd.f32 %v886, %v997
  %v1087 = vadd.f32 %v887, %v999
  %v1088 = vadd.f32 %v888, %v1001
  %v1089 = vadd.f32 %v889, %v1003
  %v1090 = vadd.f32 %v890, %v1005
  %v1091 = vadd.f32 %v891, %v1007
  %v1092 = vadd.f32 %v892, %v1009
  %v1093 = vadd.f32 %v893, %v1011
  %v1094 = vadd.f32 %v894, %v1013
  %v1095 = vadd.f32 %v895, %v1015
  %v1096 = vmax.f32 %v1056, 0.0
  %v1097 = vmax.f32 %v1057, 0.0
  %v1098 = vmax.f32 %v1058, 0.0
  %v1099 = vmax.f32 %v1059, 0.0
  %v1100 = vmax.f32 %v1060, 0.0
  %v1101 = vmax.f32 %v1061, 0.0
  %v1102 = vmax.f32 %v1062, 0.0
  %v1103 = vmax.f32 %v1063, 0.0
  %v1104 = vmax.f32 %v1064, 0.0
  %v1105 = vmax.f32 %v1065, 0.0
  %v1106 = vmax.f32 %v1066, 0.0
  %v1107 = vmax.f32 %v1067, 0.0
  %v1108 = vmax.f32 %v1068, 0.0
  %v1109 = vmax.f32 %v1069, 0.0
  %v1110 = vmax.f32 %v1070, 0.0
  %v1111 = vmax.f32 %v1071, 0.0
  %v1112 = vmax.f32 %v1072, 0.0
  %v1113 = vmax.f32 %v1073, 0.0
  %v1114 = vmax.f32 %v1074, 0.0
  %v1115 = vmax.f32 %v1075, 0.0
  %v1116 = vmax.f32 %v1076, 0.0
  %v1117 = vmax.f32 %v1077, 0.0
  %v1118 = vmax.f32 %v1078, 0.0
  %v1119 = vmax.f32 %v1079, 0.0
  %v1120 = vmax.f32 %v1080, 0.0
  %v1121 = vmax.f32 %v1081, 0.0
  %v1122 = vmax.f32 %v1082, 0.0
  %v1123 = vmax.f32 %v1083, 0.0
  %v1124 = vmax.f32 %v1084, 0.0
  %v1125 = vmax.f32 %v1085, 0.0
  %v1126 = vmax.f32 %v1086, 0.0
  %v1127 = vmax.f32 %v1087, 0.0
  %v1128 = vmax.f32 %v1088, 0.0
  %v1129 = vmax.f32 %v1089, 0.0
  %v1130 = vmax.f32 %v1090, 0.0
  %v1131 = vmax.f32 %v1091, 0.0
  %v1132 = vmax.f32 %v1092, 0.0
  %v1133 = vmax.f32 %v1093, 0.0
  %v1134 = vmax.f32 %v1094, 0.0
  %v1135 = vmax.f32 %v1095, 0.0
  %v1136 = vld [vmem:[%s3] sm:$0xff]
  %v1137 = vld [vmem:[%s3 + $0x8] sm:$0xff]
  %vm1138 = vcmask 130048
  %v1140 = vsel %vm1138, %v1096, 0
  %v1143 = vsel %vm1138, %v1097, 0
  %v1146 = vsel %vm1138, %v1098, 0
  %v1149 = vsel %vm1138, %v1099, 0
  %v1152 = vsel %vm1138, %v1100, 0
  %v1155 = vsel %vm1138, %v1101, 0
  %v1158 = vsel %vm1138, %v1102, 0
  %v1161 = vsel %vm1138, %v1103, 0
  %v1164 = vsel %vm1138, %v1104, 0
  %v1167 = vsel %vm1138, %v1105, 0
  %v1170 = vsel %vm1138, %v1106, 0
  %v1173 = vsel %vm1138, %v1107, 0
  %v1176 = vsel %vm1138, %v1108, 0
  %v1179 = vsel %vm1138, %v1109, 0
  %v1182 = vsel %vm1138, %v1110, 0
  %v1185 = vsel %vm1138, %v1111, 0
  %v1188 = vsel %vm1138, %v1112, 0
  %v1191 = vsel %vm1138, %v1113, 0
  %v1194 = vsel %vm1138, %v1114, 0
  %v1197 = vsel %vm1138, %v1115, 0
  %v1200 = vsel %vm1138, %v1116, 0
  %v1203 = vsel %vm1138, %v1117, 0
  %v1206 = vsel %vm1138, %v1118, 0
  %v1209 = vsel %vm1138, %v1119, 0
  %v1212 = vsel %vm1138, %v1120, 0
  %v1215 = vsel %vm1138, %v1121, 0
  %v1218 = vsel %vm1138, %v1122, 0
  %v1221 = vsel %vm1138, %v1123, 0
  %v1224 = vsel %vm1138, %v1124, 0
  %v1227 = vsel %vm1138, %v1125, 0
  %v1230 = vsel %vm1138, %v1126, 0
  %v1233 = vsel %vm1138, %v1127, 0
  %v1236 = vsel %vm1138, %v1128, 0
  %v1239 = vsel %vm1138, %v1129, 0
  %v1242 = vsel %vm1138, %v1130, 0
  %v1245 = vsel %vm1138, %v1131, 0
  %v1248 = vsel %vm1138, %v1132, 0
  %v1251 = vsel %vm1138, %v1133, 0
  %v1254 = vsel %vm1138, %v1134, 0
  %v1257 = vsel %vm1138, %v1135, 0
  %1259 = vmatprep.subr.mxu0 0.0
  %1260 = vmatpush1.msra.mxu0 %v1136
  %1261 = vmatprep.subr.mxu0 0.0
  %1262 = vmatpush1.msra.mxu0 %v1137
  %1263 = vmatprep.subr.mxu0 0.0
  %1264 = vmatpush1.msra.mxu0 0.0
  %1265 = vmatprep.subr.mxu0 0.0
  %1266 = vmatpush1.msra.mxu0 0.0
  %1267 = vmatprep.subr.mxu0 0.0
  %1268 = vmatpush1.msra.mxu0 0.0
  %1269 = vmatprep.subr.mxu0 0.0
  %1270 = vmatpush1.msra.mxu0 0.0
  %1271 = vmatprep.subr.mxu0 0.0
  %1272 = vmatpush1.msra.mxu0 0.0
  %1273 = vmatprep.subr.mxu0 0.0
  %1274 = vmatpush1.msra.mxu0 0.0
  %1275 = vmatprep.subr.mxu0 0.0
  %1276 = vmatpush1.msra.mxu0 0.0
  %1277 = vmatprep.subr.mxu0 0.0
  %1278 = vmatpush1.msra.mxu0 0.0
  %1279 = vmatprep.subr.mxu0 0.0
  %1280 = vmatpush1.msra.mxu0 0.0
  %1281 = vmatprep.subr.mxu0 0.0
  %1282 = vmatpush1.msra.mxu0 0.0
  %1283 = vmatprep.subr.mxu0 0.0
  %1284 = vmatpush1.msra.mxu0 0.0
  %1285 = vmatprep.subr.mxu0 0.0
  %1286 = vmatpush1.msra.mxu0 0.0
  %1287 = vmatprep.subr.mxu0 0.0
  %1288 = vmatpush1.msra.mxu0 0.0
  %1289 = vmatprep.subr.mxu0 0.0
  %1290 = vmatpush1.msra.mxu0 0.0
  %1291 = vmatprep.subr.mxu0 0.0
  %1292 = vmatpush1.msra.mxu0 0.0
  %1293 = vmatprep.subr.mxu0 0.0
  %1294 = vmatpush1.msra.mxu0 0.0
  %1295 = vmatprep.subr.mxu0 0.0
  %1296 = vmatpush1.msra.mxu0 0.0
  %1297 = vmatprep.subr.mxu0 0.0
  %1298 = vmatpush1.msra.mxu0 0.0
  %1299 = vmatprep.subr.mxu0 0.0
  %1300 = vmatpush1.msra.mxu0 0.0
  %1301 = vmatprep.subr.mxu0 0.0
  %1302 = vmatpush1.msra.mxu0 0.0
  %1303 = vmatprep.subr.mxu0 0.0
  %1304 = vmatpush1.msra.mxu0 0.0
  %1305 = vmatprep.subr.mxu0 0.0
  %1306 = vmatpush1.msra.mxu0 0.0
  %1307 = vmatprep.subr.mxu0 0.0
  %1308 = vmatpush1.msra.mxu0 0.0
  %1309 = vmatprep.subr.mxu0 0.0
  %1310 = vmatpush1.msra.mxu0 0.0
  %1311 = vmatprep.subr.mxu0 0.0
  %1312 = vmatpush1.msra.mxu0 0.0
  %1313 = vmatprep.subr.mxu0 0.0
  %1314 = vmatpush1.msra.mxu0 0.0
  %1315 = vmatprep.subr.mxu0 0.0
  %1316 = vmatpush1.msra.mxu0 0.0
  %1317 = vmatprep.subr.mxu0 0.0
  %1318 = vmatpush1.msra.mxu0 0.0
  %1319 = vmatprep.subr.mxu0 0.0
  %1320 = vmatpush1.msra.mxu0 0.0
  %1321 = vmatprep.subr.mxu0 0.0
  %1322 = vmatpush1.msra.mxu0 0.0
  %1323 = vmatprep.mubr.f32.mxu0 0.0
  %1324 = vmatmul.mubr.f32.gmra.mrb[0].mxu0 %v1140
  %v1325 = vpop.f32.mrb[0].mxu0
  %v1326 = vadd.f32 0.0, %v1325
  %v1327 = vpop.f32.mrb[0].mxu0
  %1328 = vmatprep.mubr.f32.mxu0 0.0
  %1329 = vmatmul.mubr.f32.gmra.mrb[0].mxu0 %v1143
  %v1330 = vpop.f32.mrb[0].mxu0
  %v1331 = vadd.f32 0.0, %v1330
  %v1332 = vpop.f32.mrb[0].mxu0
  %1333 = vmatprep.mubr.f32.mxu0 0.0
  %1334 = vmatmul.mubr.f32.gmra.mrb[0].mxu0 %v1146
  %v1335 = vpop.f32.mrb[0].mxu0
  %v1336 = vadd.f32 0.0, %v1335
  %v1337 = vpop.f32.mrb[0].mxu0
  %1338 = vmatprep.mubr.f32.mxu0 0.0
  %1339 = vmatmul.mubr.f32.gmra.mrb[0].mxu0 %v1149
  %v1340 = vpop.f32.mrb[0].mxu0
  %v1341 = vadd.f32 0.0, %v1340
  %v1342 = vpop.f32.mrb[0].mxu0
  %1343 = vmatprep.mubr.f32.mxu0 0.0
  %1344 = vmatmul.mubr.f32.gmra.mrb[0].mxu0 %v1152
  %v1345 = vpop.f32.mrb[0].mxu0
  %v1346 = vadd.f32 0.0, %v1345
  %v1347 = vpop.f32.mrb[0].mxu0
  %1348 = vmatprep.mubr.f32.mxu0 0.0
  %1349 = vmatmul.mubr.f32.gmra.mrb[0].mxu0 %v1155
  %v1350 = vpop.f32.mrb[0].mxu0
  %v1351 = vadd.f32 0.0, %v1350
  %v1352 = vpop.f32.mrb[0].mxu0
  %1353 = vmatprep.mubr.f32.mxu0 0.0
  %1354 = vmatmul.mubr.f32.gmra.mrb[0].mxu0 %v1158
  %v1355 = vpop.f32.mrb[0].mxu0
  %v1356 = vadd.f32 0.0, %v1355
  %v1357 = vpop.f32.mrb[0].mxu0
  %1358 = vmatprep.mubr.f32.mxu0 0.0
  %1359 = vmatmul.mubr.f32.gmra.mrb[0].mxu0 %v1161
  %v1360 = vpop.f32.mrb[0].mxu0
  %v1361 = vadd.f32 0.0, %v1360
  %v1362 = vpop.f32.mrb[0].mxu0
  %1363 = vmatprep.mubr.f32.mxu0 0.0
  %1364 = vmatmul.mubr.f32.gmra.mrb[0].mxu0 %v1164
  %v1365 = vpop.f32.mrb[0].mxu0
  %v1366 = vadd.f32 0.0, %v1365
  %v1367 = vpop.f32.mrb[0].mxu0
  %1368 = vmatprep.mubr.f32.mxu0 0.0
  %1369 = vmatmul.mubr.f32.gmra.mrb[0].mxu0 %v1167
  %v1370 = vpop.f32.mrb[0].mxu0
  %v1371 = vadd.f32 0.0, %v1370
  %v1372 = vpop.f32.mrb[0].mxu0
  %1373 = vmatprep.mubr.f32.mxu0 0.0
  %1374 = vmatmul.mubr.f32.gmra.mrb[0].mxu0 %v1170
  %v1375 = vpop.f32.mrb[0].mxu0
  %v1376 = vadd.f32 0.0, %v1375
  %v1377 = vpop.f32.mrb[0].mxu0
  %1378 = vmatprep.mubr.f32.mxu0 0.0
  %1379 = vmatmul.mubr.f32.gmra.mrb[0].mxu0 %v1173
  %v1380 = vpop.f32.mrb[0].mxu0
  %v1381 = vadd.f32 0.0, %v1380
  %v1382 = vpop.f32.mrb[0].mxu0
  %1383 = vmatprep.mubr.f32.mxu0 0.0
  %1384 = vmatmul.mubr.f32.gmra.mrb[0].mxu0 %v1176
  %v1385 = vpop.f32.mrb[0].mxu0
  %v1386 = vadd.f32 0.0, %v1385
  %v1387 = vpop.f32.mrb[0].mxu0
  %1388 = vmatprep.mubr.f32.mxu0 0.0
  %1389 = vmatmul.mubr.f32.gmra.mrb[0].mxu0 %v1179
  %v1390 = vpop.f32.mrb[0].mxu0
  %v1391 = vadd.f32 0.0, %v1390
  %v1392 = vpop.f32.mrb[0].mxu0
  %1393 = vmatprep.mubr.f32.mxu0 0.0
  %1394 = vmatmul.mubr.f32.gmra.mrb[0].mxu0 %v1182
  %v1395 = vpop.f32.mrb[0].mxu0
  %v1396 = vadd.f32 0.0, %v1395
  %v1397 = vpop.f32.mrb[0].mxu0
  %1398 = vmatprep.mubr.f32.mxu0 0.0
  %1399 = vmatmul.mubr.f32.gmra.mrb[0].mxu0 %v1185
  %v1400 = vpop.f32.mrb[0].mxu0
  %v1401 = vadd.f32 0.0, %v1400
  %v1402 = vpop.f32.mrb[0].mxu0
  %1403 = vmatprep.mubr.f32.mxu0 0.0
  %1404 = vmatmul.mubr.f32.gmra.mrb[0].mxu0 %v1188
  %v1405 = vpop.f32.mrb[0].mxu0
  %v1406 = vadd.f32 0.0, %v1405
  %v1407 = vpop.f32.mrb[0].mxu0
  %1408 = vmatprep.mubr.f32.mxu0 0.0
  %1409 = vmatmul.mubr.f32.gmra.mrb[0].mxu0 %v1191
  %v1410 = vpop.f32.mrb[0].mxu0
  %v1411 = vadd.f32 0.0, %v1410
  %v1412 = vpop.f32.mrb[0].mxu0
  %1413 = vmatprep.mubr.f32.mxu0 0.0
  %1414 = vmatmul.mubr.f32.gmra.mrb[0].mxu0 %v1194
  %v1415 = vpop.f32.mrb[0].mxu0
  %v1416 = vadd.f32 0.0, %v1415
  %v1417 = vpop.f32.mrb[0].mxu0
  %1418 = vmatprep.mubr.f32.mxu0 0.0
  %1419 = vmatmul.mubr.f32.gmra.mrb[0].mxu0 %v1197
  %v1420 = vpop.f32.mrb[0].mxu0
  %v1421 = vadd.f32 0.0, %v1420
  %v1422 = vpop.f32.mrb[0].mxu0
  %1423 = vmatprep.mubr.f32.mxu0 0.0
  %1424 = vmatmul.mubr.f32.gmra.mrb[0].mxu0 %v1200
  %v1425 = vpop.f32.mrb[0].mxu0
  %v1426 = vadd.f32 0.0, %v1425
  %v1427 = vpop.f32.mrb[0].mxu0
  %1428 = vmatprep.mubr.f32.mxu0 0.0
  %1429 = vmatmul.mubr.f32.gmra.mrb[0].mxu0 %v1203
  %v1430 = vpop.f32.mrb[0].mxu0
  %v1431 = vadd.f32 0.0, %v1430
  %v1432 = vpop.f32.mrb[0].mxu0
  %1433 = vmatprep.mubr.f32.mxu0 0.0
  %1434 = vmatmul.mubr.f32.gmra.mrb[0].mxu0 %v1206
  %v1435 = vpop.f32.mrb[0].mxu0
  %v1436 = vadd.f32 0.0, %v1435
  %v1437 = vpop.f32.mrb[0].mxu0
  %1438 = vmatprep.mubr.f32.mxu0 0.0
  %1439 = vmatmul.mubr.f32.gmra.mrb[0].mxu0 %v1209
  %v1440 = vpop.f32.mrb[0].mxu0
  %v1441 = vadd.f32 0.0, %v1440
  %v1442 = vpop.f32.mrb[0].mxu0
  %1443 = vmatprep.mubr.f32.mxu0 0.0
  %1444 = vmatmul.mubr.f32.gmra.mrb[0].mxu0 %v1212
  %v1445 = vpop.f32.mrb[0].mxu0
  %v1446 = vadd.f32 0.0, %v1445
  %v1447 = vpop.f32.mrb[0].mxu0
  %1448 = vmatprep.mubr.f32.mxu0 0.0
  %1449 = vmatmul.mubr.f32.gmra.mrb[0].mxu0 %v1215
  %v1450 = vpop.f32.mrb[0].mxu0
  %v1451 = vadd.f32 0.0, %v1450
  %v1452 = vpop.f32.mrb[0].mxu0
  %1453 = vmatprep.mubr.f32.mxu0 0.0
  %1454 = vmatmul.mubr.f32.gmra.mrb[0].mxu0 %v1218
  %v1455 = vpop.f32.mrb[0].mxu0
  %v1456 = vadd.f32 0.0, %v1455
  %v1457 = vpop.f32.mrb[0].mxu0
  %1458 = vmatprep.mubr.f32.mxu0 0.0
  %1459 = vmatmul.mubr.f32.gmra.mrb[0].mxu0 %v1221
  %v1460 = vpop.f32.mrb[0].mxu0
  %v1461 = vadd.f32 0.0, %v1460
  %v1462 = vpop.f32.mrb[0].mxu0
  %1463 = vmatprep.mubr.f32.mxu0 0.0
  %1464 = vmatmul.mubr.f32.gmra.mrb[0].mxu0 %v1224
  %v1465 = vpop.f32.mrb[0].mxu0
  %v1466 = vadd.f32 0.0, %v1465
  %v1467 = vpop.f32.mrb[0].mxu0
  %1468 = vmatprep.mubr.f32.mxu0 0.0
  %1469 = vmatmul.mubr.f32.gmra.mrb[0].mxu0 %v1227
  %v1470 = vpop.f32.mrb[0].mxu0
  %v1471 = vadd.f32 0.0, %v1470
  %v1472 = vpop.f32.mrb[0].mxu0
  %1473 = vmatprep.mubr.f32.mxu0 0.0
  %1474 = vmatmul.mubr.f32.gmra.mrb[0].mxu0 %v1230
  %v1475 = vpop.f32.mrb[0].mxu0
  %v1476 = vadd.f32 0.0, %v1475
  %v1477 = vpop.f32.mrb[0].mxu0
  %1478 = vmatprep.mubr.f32.mxu0 0.0
  %1479 = vmatmul.mubr.f32.gmra.mrb[0].mxu0 %v1233
  %v1480 = vpop.f32.mrb[0].mxu0
  %v1481 = vadd.f32 0.0, %v1480
  %v1482 = vpop.f32.mrb[0].mxu0
  %1483 = vmatprep.mubr.f32.mxu0 0.0
  %1484 = vmatmul.mubr.f32.gmra.mrb[0].mxu0 %v1236
  %v1485 = vpop.f32.mrb[0].mxu0
  %v1486 = vadd.f32 0.0, %v1485
  %v1487 = vpop.f32.mrb[0].mxu0
  %1488 = vmatprep.mubr.f32.mxu0 0.0
  %1489 = vmatmul.mubr.f32.gmra.mrb[0].mxu0 %v1239
  %v1490 = vpop.f32.mrb[0].mxu0
  %v1491 = vadd.f32 0.0, %v1490
  %v1492 = vpop.f32.mrb[0].mxu0
  %1493 = vmatprep.mubr.f32.mxu0 0.0
  %1494 = vmatmul.mubr.f32.gmra.mrb[0].mxu0 %v1242
  %v1495 = vpop.f32.mrb[0].mxu0
  %v1496 = vadd.f32 0.0, %v1495
  %v1497 = vpop.f32.mrb[0].mxu0
  %1498 = vmatprep.mubr.f32.mxu0 0.0
  %1499 = vmatmul.mubr.f32.gmra.mrb[0].mxu0 %v1245
  %v1500 = vpop.f32.mrb[0].mxu0
  %v1501 = vadd.f32 0.0, %v1500
  %v1502 = vpop.f32.mrb[0].mxu0
  %1503 = vmatprep.mubr.f32.mxu0 0.0
  %1504 = vmatmul.mubr.f32.gmra.mrb[0].mxu0 %v1248
  %v1505 = vpop.f32.mrb[0].mxu0
  %v1506 = vadd.f32 0.0, %v1505
  %v1507 = vpop.f32.mrb[0].mxu0
  %1508 = vmatprep.mubr.f32.mxu0 0.0
  %1509 = vmatmul.mubr.f32.gmra.mrb[0].mxu0 %v1251
  %v1510 = vpop.f32.mrb[0].mxu0
  %v1511 = vadd.f32 0.0, %v1510
  %v1512 = vpop.f32.mrb[0].mxu0
  %1513 = vmatprep.mubr.f32.mxu0 0.0
  %1514 = vmatmul.mubr.f32.gmra.mrb[0].mxu0 %v1254
  %v1515 = vpop.f32.mrb[0].mxu0
  %v1516 = vadd.f32 0.0, %v1515
  %v1517 = vpop.f32.mrb[0].mxu0
  %1518 = vmatprep.mubr.f32.mxu0 0.0
  %1519 = vmatmul.mubr.f32.gmra.mrb[0].mxu0 %v1257
  %v1520 = vpop.f32.mrb[0].mxu0
  %v1521 = vadd.f32 0.0, %v1520
  %v1522 = vpop.f32.mrb[0].mxu0
  %1523 = vdwg.mxu0
  %vm1524 = vcmask 64512
  %1525 = vst.msk [vmem:[%s4] sm:$0xff] %vm1524, %v1326
  %1526 = vst.msk [vmem:[%s4 + $0x8] sm:$0xff] %vm1524, %v1331
  %1527 = vst.msk [vmem:[%s4 + $0x10] sm:$0xff] %vm1524, %v1336
  %1528 = vst.msk [vmem:[%s4 + $0x18] sm:$0xff] %vm1524, %v1341
  %1529 = vst.msk [vmem:[%s4 + $0x20] sm:$0xff] %vm1524, %v1346
  %1530 = vst.msk [vmem:[%s4 + $0x28] sm:$0xff] %vm1524, %v1351
  %1531 = vst.msk [vmem:[%s4 + $0x30] sm:$0xff] %vm1524, %v1356
  %1532 = vst.msk [vmem:[%s4 + $0x38] sm:$0xff] %vm1524, %v1361
  %1533 = vst.msk [vmem:[%s4 + $0x40] sm:$0xff] %vm1524, %v1366
  %1534 = vst.msk [vmem:[%s4 + $0x48] sm:$0xff] %vm1524, %v1371
  %1535 = vst.msk [vmem:[%s4 + $0x50] sm:$0xff] %vm1524, %v1376
  %1536 = vst.msk [vmem:[%s4 + $0x58] sm:$0xff] %vm1524, %v1381
  %1537 = vst.msk [vmem:[%s4 + $0x60] sm:$0xff] %vm1524, %v1386
  %1538 = vst.msk [vmem:[%s4 + $0x68] sm:$0xff] %vm1524, %v1391
  %1539 = vst.msk [vmem:[%s4 + $0x70] sm:$0xff] %vm1524, %v1396
  %1540 = vst.msk [vmem:[%s4 + $0x78] sm:$0xff] %vm1524, %v1401
  %1541 = vst.msk [vmem:[%s4 + $0x80] sm:$0xff] %vm1524, %v1406
  %1542 = vst.msk [vmem:[%s4 + $0x88] sm:$0xff] %vm1524, %v1411
  %1543 = vst.msk [vmem:[%s4 + $0x90] sm:$0xff] %vm1524, %v1416
  %1544 = vst.msk [vmem:[%s4 + $0x98] sm:$0xff] %vm1524, %v1421
  %1545 = vst.msk [vmem:[%s4 + $0xa0] sm:$0xff] %vm1524, %v1426
  %1546 = vst.msk [vmem:[%s4 + $0xa8] sm:$0xff] %vm1524, %v1431
  %1547 = vst.msk [vmem:[%s4 + $0xb0] sm:$0xff] %vm1524, %v1436
  %1548 = vst.msk [vmem:[%s4 + $0xb8] sm:$0xff] %vm1524, %v1441
  %1549 = vst.msk [vmem:[%s4 + $0xc0] sm:$0xff] %vm1524, %v1446
  %1550 = vst.msk [vmem:[%s4 + $0xc8] sm:$0xff] %vm1524, %v1451
  %1551 = vst.msk [vmem:[%s4 + $0xd0] sm:$0xff] %vm1524, %v1456
  %1552 = vst.msk [vmem:[%s4 + $0xd8] sm:$0xff] %vm1524, %v1461
  %1553 = vst.msk [vmem:[%s4 + $0xe0] sm:$0xff] %vm1524, %v1466
  %1554 = vst.msk [vmem:[%s4 + $0xe8] sm:$0xff] %vm1524, %v1471
  %1555 = vst.msk [vmem:[%s4 + $0xf0] sm:$0xff] %vm1524, %v1476
  %1556 = vst.msk [vmem:[%s4 + $0xf8] sm:$0xff] %vm1524, %v1481
  %1557 = vst.msk [vmem:[%s4 + $0x100] sm:$0xff] %vm1524, %v1486
  %1558 = vst.msk [vmem:[%s4 + $0x108] sm:$0xff] %vm1524, %v1491
  %1559 = vst.msk [vmem:[%s4 + $0x110] sm:$0xff] %vm1524, %v1496
  %1560 = vst.msk [vmem:[%s4 + $0x118] sm:$0xff] %vm1524, %v1501
  %1561 = vst.msk [vmem:[%s4 + $0x120] sm:$0xff] %vm1524, %v1506
  %1562 = vst.msk [vmem:[%s4 + $0x128] sm:$0xff] %vm1524, %v1511
  %1563 = vst.msk [vmem:[%s4 + $0x130] sm:$0xff] %vm1524, %v1516
  %1564 = vst.msk [vmem:[%s4 + $0x138] sm:$0xff] %vm1524, %v1521
  // Predicated region
  $region18: #{stgcn_block_forward.4} parent=0 // pred_check
    _
  $region19: #{stgcn_block_forward.4} parent=0 // pred_check_branch
    %1566 = sbr.rel (0) target = $region21
  $region20: #{stgcn_block_forward.4} parent=0 // pred_region
    _
  $region21: #{stgcn_block_forward.4} parent=0 // pred_fallthru
    _
  // Predicated region
  $region22: #{stgcn_block_forward.4} parent=0 // pred_check
    _
  $region23: #{stgcn_block_forward.4} parent=0 // pred_check_branch
    %1568 = sbr.rel (0) target = $region25
  $region24: #{stgcn_block_forward.4} parent=0 // pred_region
    _
  $region25: #{stgcn_block_forward.4} parent=0 // pred_fallthru
    _

// kernel: stgcn_block_forward.7
$region0: #{stgcn_block_forward.7}
  #allocation0 [shape = 'u32[]', space=smem, size = 0x4, offset = 0x4, fixed_abs, tag = 'smem constant byte address 0x4 - core index']
  #allocation1 [shape = 'u32[144,128]{1,0:T(1,128)}', space=vmem, size = 0x12000, scoped, tag = 'internal scratch']
  %s0 = inlined_call_operand.vmem [shape: f32[16,2,8,16], index: 0, kind: input, shape index: {}]
  %s1 = inlined_call_operand.vmem [shape: f32[16], index: 1, kind: input, shape index: {}]
  %s2 = inlined_call_operand.vmem [shape: f32[16], index: 2, kind: input, shape index: {}]
  %s3 = inlined_call_operand.hbm [shape: f32[2,16,8,16], index: 3, kind: output, shape index: {}]
  %s4 = sld [smem:[#allocation0]]
  $region53: #{stgcn_block_forward.7} parent=0
    _
  %s6 = ssub.s32 1, %s4
  %s7 = scalar_select 0, %s6, %s4
  $region1: #{stgcn_block_forward.7} parent=0
    #allocation2 [shape = 'u8[512]{0}', space=smem, size = 0x200, scoped, tag = 'input window, operand 1, single buffered']
    #allocation3 [shape = 's32[2]{0}', space=sflag, size = 0x8, scoped, tag = 'scoped memory for stgcn_block_forward.7']
    #allocation4 [shape = 's32[2]{0}', space=sflag, size = 0x8, scoped, tag = 'scoped memory for stgcn_block_forward.7']
    #allocation5 [shape = 'u8[512]{0}', space=smem, size = 0x200, scoped, tag = 'input window, operand 2, single buffered']
    #allocation6 [shape = 's32[1]{0}', space=sflag, size = 0x4, scoped, tag = 'scoped memory for stgcn_block_forward.7']
    #allocation7 [shape = 'u8[16384]{0}', space=vmem, size = 0x4000, scoped, tag = 'output window, operand 0']
    %8 = vsyncpa [#allocation4], 0
    %9 = vsyncpa [#allocation6], 0
    %10 = vsyncpa [#allocation3], 0
    %s11 = scalar_lea.sflag [#allocation3], 1
    %12 = vsyncpa %s11, 0
    loop: start=0, step=1, limit=18
    $region2: #{stgcn_block_forward.7} parent=1 // loop_pre_header
      _
    $region3: #{stgcn_block_forward.7} parent=1 // loop_header
      %s14 = sphi 0, %s18
      %p15 = scmp.ge.s32.totalorder %s14, 18
      %s24 = sphi 0, %s26
      %s27 = sphi 0, %s24
      %s28 = sphi 0, %s27
      %s44 = sphi 0, %s28
      %s48 = sphi 0, %s48
      %s50 = sphi 0, %s48
      %s51 = sphi 0, %s50
      %s65 = sphi 0, %s51
      %s69 = sphi 0, %s69
      %s71 = sphi 0, %s69
      %s72 = sphi 0, %s71
      %s86 = sphi 0, %s72
      %s92 = sphi 0, %s94
      %s95 = sphi 0, %s92
      %s96 = sphi 0, %s95
      %s112 = sphi 0, %s96
    $region4: #{stgcn_block_forward.7} parent=1 // loop_header_branch
      %17 = sbr.rel (%p15) target = $region8
    $region5: #{stgcn_block_forward.7} parent=1 // loop_body
      %s19 = ssub.s32 %s14, 1
      %s20 = ssub.s32 %s14, 2
      %s21 = sadd.s32 %s14, 1
      %s22 = ssub.s32 %s14, %s21
      %p23 = scmp.eq.s32.totalorder %s22, 0
      %s25 = sadd.s32 %s24, 1
      %s26 = scalar_select %p23, %s24, %s25
      %p29 = pneg %p23
      %p30 = scmp.eq.s32.totalorder %s14, 15
      %p31 = por %p29, %p30
      %p32 = scmp.ne.s32.totalorder %s24, %s27
      %p33 = scmp.eq.s32.totalorder %s14, 0
      %p34 = por %p32, %p33
      %p35 = scmp.ne.s32.totalorder %s24, %s27
      %p36 = scmp.eq.s32.totalorder %s19, 15
      %p37 = por %p35, %p36
      %p38 = scmp.ne.s32.totalorder %s27, %s28
      %p39 = scmp.eq.s32.totalorder %s19, 0
      %p40 = por %p38, %p39
      %p41 = scmp.ne.s32.totalorder %s27, %s28
      %p42 = scmp.eq.s32.totalorder %s20, 15
      %p43 = por %p41, %p42
      %p45 = scmp.ne.s32.totalorder %s28, %s44
      %p46 = scmp.eq.s32.totalorder %s20, 0
      %p47 = por %p45, %p46
      %s49 = sadd.s32 %s48, 1
      %p52 = scmp.eq.s32.totalorder %s14, 15
      %p53 = scmp.ne.s32.totalorder %s48, %s50
      %p54 = scmp.eq.s32.totalorder %s14, 0
      %p55 = por %p53, %p54
      %p56 = scmp.ne.s32.totalorder %s48, %s50
      %p57 = scmp.eq.s32.totalorder %s19, 15
      %p58 = por %p56, %p57
      %p59 = scmp.ne.s32.totalorder %s50, %s51
      %p60 = scmp.eq.s32.totalorder %s19, 0
      %p61 = por %p59, %p60
      %p62 = scmp.ne.s32.totalorder %s50, %s51
      %p63 = scmp.eq.s32.totalorder %s20, 15
      %p64 = por %p62, %p63
      %p66 = scmp.ne.s32.totalorder %s51, %s65
      %p67 = scmp.eq.s32.totalorder %s20, 0
      %p68 = por %p66, %p67
      %s70 = sadd.s32 %s69, 1
      %p73 = scmp.eq.s32.totalorder %s14, 15
      %p74 = scmp.ne.s32.totalorder %s69, %s71
      %p75 = scmp.eq.s32.totalorder %s14, 0
      %p76 = por %p74, %p75
      %p77 = scmp.ne.s32.totalorder %s69, %s71
      %p78 = scmp.eq.s32.totalorder %s19, 15
      %p79 = por %p77, %p78
      %p80 = scmp.ne.s32.totalorder %s71, %s72
      %p81 = scmp.eq.s32.totalorder %s19, 0
      %p82 = por %p80, %p81
      %p83 = scmp.ne.s32.totalorder %s71, %s72
      %p84 = scmp.eq.s32.totalorder %s20, 15
      %p85 = por %p83, %p84
      %p87 = scmp.ne.s32.totalorder %s72, %s86
      %p88 = scmp.eq.s32.totalorder %s20, 0
      %p89 = por %p87, %p88
      %s90 = ssub.s32 %s14, %s21
      %p91 = scmp.eq.s32.totalorder %s90, 0
      %s93 = sadd.s32 %s92, 1
      %s94 = scalar_select %p91, %s92, %s93
      %p97 = pneg %p91
      %p98 = scmp.eq.s32.totalorder %s14, 15
      %p99 = por %p97, %p98
      %p100 = scmp.ne.s32.totalorder %s92, %s95
      %p101 = scmp.eq.s32.totalorder %s14, 0
      %p102 = por %p100, %p101
      %p103 = scmp.ne.s32.totalorder %s92, %s95
      %p104 = scmp.eq.s32.totalorder %s19, 15
      %p105 = por %p103, %p104
      %p106 = scmp.ne.s32.totalorder %s95, %s96
      %p107 = scmp.eq.s32.totalorder %s19, 0
      %p108 = por %p106, %p107
      %p109 = scmp.ne.s32.totalorder %s95, %s96
      %p110 = scmp.eq.s32.totalorder %s20, 15
      %p111 = por %p109, %p110
      %p113 = scmp.ne.s32.totalorder %s96, %s112
      %p114 = scmp.eq.s32.totalorder %s20, 0
      %p115 = por %p113, %p114
      %p116 = scmp.le.s32.totalorder 1, %s14
      %p117 = scmp.lt.s32.totalorder %s14, 17
      %p118 = pnand %p116, %p117
      %p119 = pneg %p118
      // Predicated region
      $region9: #{stgcn_block_forward.7} parent=5 // pred_check
        _
      $region10: #{stgcn_block_forward.7} parent=5 // pred_check_branch
        %121 = sbr.rel (%p118) target = $region12
      $region11: #{stgcn_block_forward.7} parent=5 // pred_region
        %s122 = ssub.s32 %s14, 1
        // Predicated region
        $region13: #{stgcn_block_forward.7} parent=11 // pred_check
          %p123 = pneg %p61
        $region14: #{stgcn_block_forward.7} parent=11 // pred_check_branch
          %125 = sbr.rel (%p123) target = $region16
        $region15: #{stgcn_block_forward.7} parent=11 // pred_region
          %s127 = ssub.s32 16, 16
          %128 = vsyncadd [#allocation4], %s127
          %s130 = sshll.u32 %s1, 4
          %s131 = int_to_ptr.vmem [resolvable:$true] %s130
          %133 = dma.vmem_to_smem %s131, 16, [#allocation2], [#allocation4]
        $region16: #{stgcn_block_forward.7} parent=11 // pred_fallthru
          _
        // Predicated region
        $region17: #{stgcn_block_forward.7} parent=11 // pred_check
          %p134 = pneg %p82
        $region18: #{stgcn_block_forward.7} parent=11 // pred_check_branch
          %136 = sbr.rel (%p134) target = $region20
        $region19: #{stgcn_block_forward.7} parent=11 // pred_region
          %s138 = ssub.s32 16, 16
          %139 = vsyncadd [#allocation6], %s138
          %s141 = sshll.u32 %s2, 4
          %s142 = int_to_ptr.vmem [resolvable:$true] %s141
          %144 = dma.vmem_to_smem %s142, 16, [#allocation5], [#allocation6]
        $region20: #{stgcn_block_forward.7} parent=11 // pred_fallthru
          _
      $region12: #{stgcn_block_forward.7} parent=5 // pred_fallthru
        _
      %p145 = scmp.lt.s32.totalorder %s14, 16
      // Predicated region
      $region21: #{stgcn_block_forward.7} parent=5 // pred_check
        %p146 = pneg %p145
      $region22: #{stgcn_block_forward.7} parent=5 // pred_check_branch
        %148 = sbr.rel (%p146) target = $region24
      $region23: #{stgcn_block_forward.7} parent=5 // pred_region
        // Predicated region
        $region25: #{stgcn_block_forward.7} parent=23 // pred_check
          %p149 = pneg %p34
        $region26: #{stgcn_block_forward.7} parent=23 // pred_check_branch
          %151 = sbr.rel (%p149) target = $region28
        $region27: #{stgcn_block_forward.7} parent=23 // pred_region
          %p152 = scmp.lt.s32.totalorder %s14, 15
          %s153 = scalar_select %p152, %s14, 15
          %s154 = smul.addr %s153, 2
          %s155 = smul.addr %s154, 8
          %s156 = scalar_lea.vmem %s0, %s155
        $region28: #{stgcn_block_forward.7} parent=23 // pred_fallthru
          _
      $region24: #{stgcn_block_forward.7} parent=5 // pred_fallthru
        _
      %p157 = scmp.le.s32.totalorder 1, %s14
      %p158 = scmp.lt.s32.totalorder %s14, 17
      %p159 = pnand %p157, %p158
      %p160 = pneg %p159
      // Predicated region
      $region29: #{stgcn_block_forward.7} parent=5 // pred_check
        _
      $region30: #{stgcn_block_forward.7} parent=5 // pred_check_branch
        %162 = sbr.rel (%p159) target = $region32
      $region31: #{stgcn_block_forward.7} parent=5 // pred_region
        %s163 = ssub.s32 %s14, 1
        // Predicated region
        $region33: #{stgcn_block_forward.7} parent=31 // pred_check
          %p164 = pneg %p61
        $region34: #{stgcn_block_forward.7} parent=31 // pred_check_branch
          %166 = sbr.rel (%p164) target = $region36
        $region35: #{stgcn_block_forward.7} parent=31 // pred_region
          %167 = dma.done [#allocation4], 16
        $region36: #{stgcn_block_forward.7} parent=31 // pred_fallthru
          _
        // Predicated region
        $region37: #{stgcn_block_forward.7} parent=31 // pred_check
          %p168 = pneg %p82
        $region38: #{stgcn_block_forward.7} parent=31 // pred_check_branch
          %170 = sbr.rel (%p168) target = $region40
        $region39: #{stgcn_block_forward.7} parent=31 // pred_region
          %171 = dma.done [#allocation6], 16
        $region40: #{stgcn_block_forward.7} parent=31 // pred_fallthru
          _
        %172 = sfence
        %p173 = scmp.lt.s32.totalorder %s19, 15
        %s174 = scalar_select %p173, %s19, 15
        %s175 = smul.addr %s174, 2
        %s176 = smul.addr %s175, 8
        %s177 = scalar_lea.vmem %s0, %s176
        %p178 = pneg %p40
        %p179 = pneg %p37
        %p180 = pneg %p61
        %p181 = pneg %p58
        %p182 = pneg %p82
        %p183 = pneg %p79
        %p184 = pneg %p108
        %p185 = pneg %p105
        %s186 = sand.u32 %s95, 1
        %s187 = scalar_lea.sflag [#allocation3], %s186
        %s188 = sand.u32 %s95, 1
        %s189 = smul.addr %s188, 16
        %s190 = scalar_lea.vmem [#allocation7], %s189
        %p191 = scmp.lt.s32.totalorder %s19, 15
        %s192 = scalar_select %p191, %s19, 15
        %s193 = smul.addr %s192, 2
        %s194 = smul.addr %s193, 8
        %s195 = scalar_lea.vmem %s0, %s194
        %v196 = vld [vmem:[%s195] sm:$0xff]
        %v197 = vld [vmem:[%s195 + $0x8] sm:$0xff]
        %vm198 = vcmask 130048
        %v199 = vsel %vm198, %v196, 0.0
        %v200 = vsel %vm198, %v197, 0.0
        %v201 = vadd.f32 %v199, %v200
        %202 = vadd.xlane.f32.xlu0 %v201
        %v203 = vpop.xlane.xlu0 %202
        %v204 = vrot.slane %v203, 4
        %v205 = vadd.f32 %v203, %v204
        %v206 = vrot.slane %v205, 2
        %v207 = vadd.f32 %v205, %v206
        %v208 = vrot.slane %v207, 1
        %v209 = vadd.f32 %v207, %v208
        %s210 = vtos %v209
        %v211 = vrcp.pop 256.0
        %s212 = vtos %v211
        %s213 = smul.f32 %s210, %s212
        %v214 = vstv %s213
        %v215 = vsub.f32 %v196, %v214
        %v216 = vsub.f32 %v197, %v214
        %v217 = vmul.f32 %v215, %v215
        %v218 = vmul.f32 %v216, %v216
        %v219 = vsel %vm198, %v217, 0.0
        %v220 = vsel %vm198, %v218, 0.0
        %v221 = vadd.f32 %v219, %v220
        %222 = vadd.xlane.f32.xlu0 %v221
        %v223 = vpop.xlane.xlu0 %222
        %v224 = vrot.slane %v223, 4
        %v225 = vadd.f32 %v223, %v224
        %v226 = vrot.slane %v225, 2
        %v227 = vadd.f32 %v225, %v226
        %v228 = vrot.slane %v227, 1
        %v229 = vadd.f32 %v227, %v228
        %s230 = vtos %v229
        %v231 = vrcp.pop 256.0
        %s232 = vtos %v231
        %s233 = smul.f32 %s230, %s232
        %s234 = sadd.f32 %s233, 1e-05
        %v235 = vstv %s234
        %v236 = vrsqrt.pop %v235
        %s237 = vtos %v236
        %s238 = sld [smem:[#allocation2 + %s19]]
        %s239 = smul.f32 %s237, %s238
        %v240 = vstv %s239
        %v241 = vmul.f32 %v215, %v240
        %v242 = vmul.f32 %v216, %v240
        %s243 = sld [smem:[#allocation5 + %s19]]
        %v244 = vstv %s243
        %v245 = vadd.f32 %v241, %v244
        %v246 = vadd.f32 %v242, %v244
        %247 = vst.msk [vmem:[%s190] sm:$0xff] %vm198, %v245
        %248 = vst.msk [vmem:[%s190 + $0x8] sm:$0xff] %vm198, %v246
        %s249 = sand.u32 %s95, 1
        %s250 = scalar_lea.sflag [#allocation3], %s249
        %s251 = sand.u32 %s95, 1
        %s252 = smul.addr %s251, 16
        %s253 = scalar_lea.vmem [#allocation7], %s252
        // Predicated region
        $region41: #{stgcn_block_forward.7} parent=31 // pred_check
          %p254 = pneg %p105
        $region42: #{stgcn_block_forward.7} parent=31 // pred_check_branch
          %256 = sbr.rel (%p254) target = $region44
        $region43: #{stgcn_block_forward.7} parent=31 // pred_region
          %s258 = ssub.s32 256, 256
          %259 = vsyncadd %s250, %s258
          %s260 = smul.addr %s19, 128
          %s261 = scalar_lea.hbm %s3, %s260
          %s262 = sshll.u32 %s253, 4
          %s263 = int_to_ptr.vmem [resolvable:$true] %s262
          %268 = dma.vmem_to_hbm [thread:$0]  %s263, 256, %s261, %s250, 128, 2048, 8
        $region44: #{stgcn_block_forward.7} parent=31 // pred_fallthru
          _
      $region32: #{stgcn_block_forward.7} parent=5 // pred_fallthru
        _
      %p269 = scmp.le.s32.totalorder 2, %s14
      // Predicated region
      $region45: #{stgcn_block_forward.7} parent=5 // pred_check
        %p270 = pneg %p269
      $region46: #{stgcn_block_forward.7} parent=5 // pred_check_branch
        %272 = sbr.rel (%p270) target = $region48
      $region47: #{stgcn_block_forward.7} parent=5 // pred_region
        %s273 = ssub.s32 %s14, 2
        // Predicated region
        $region49: #{stgcn_block_forward.7} parent=47 // pred_check
          %p274 = pneg %p111
        $region50: #{stgcn_block_forward.7} parent=47 // pred_check_branch
          %276 = sbr.rel (%p274) target = $region52
        $region51: #{stgcn_block_forward.7} parent=47 // pred_region
          %s277 = sand.u32 %s96, 1
          %s278 = scalar_lea.sflag [#allocation3], %s277
          %s279 = sand.u32 %s96, 1
          %s280 = smul.addr %s279, 16
          %s281 = scalar_lea.vmem [#allocation7], %s280
          %282 = dma.done %s278, 256
        $region52: #{stgcn_block_forward.7} parent=47 // pred_fallthru
          _
      $region48: #{stgcn_block_forward.7} parent=5 // pred_fallthru
        _
    $region6: #{stgcn_block_forward.7} parent=1 // loop_footer
      %s18 = sadd.s32 1, %s14
    $region7: #{stgcn_block_forward.7} parent=1 // loop_footer_branch
      %13 = sbr.rel target = $region3
    $region8: #{stgcn_block_forward.7} parent=1 // loop_exit
      _
    %283 = vsyncpa [#allocation3], 1
    %s284 = scalar_lea.sflag [#allocation3], 1
    %285 = vsyncpa %s284, 1
    %286 = vsyncpa [#allocation4], 1
    %s287 = scalar_lea.sflag [#allocation4], 1
    %288 = vsyncpa %s287, 1
    %289 = vsyncpa [#allocation6], 1

// kernel: stgcn_block_forward.6
$region0: #{stgcn_block_forward.6}
  #allocation0 [shape = 'u32[]', space=smem, size = 0x4, offset = 0x4, fixed_abs, tag = 'smem constant byte address 0x4 - core index']
  #allocation1 [shape = 'u32[144,128]{1,0:T(1,128)}', space=vmem, size = 0x12000, scoped, tag = 'internal scratch']
  %s0 = inlined_call_operand.vmem [shape: f32[256,24], index: 0, kind: input, shape index: {}]
  %s1 = inlined_call_operand.vmem [shape: f32[24,48], index: 1, kind: input, shape index: {}]
  %s2 = inlined_call_operand.vmem [shape: f32[1,48], index: 2, kind: input, shape index: {}]
  %s3 = inlined_call_operand.vmem [shape: f32[256,16], index: 3, kind: output, shape index: {}]
  %s4 = sld [smem:[#allocation0]]
  $region22: #{stgcn_block_forward.6} parent=0
    _
  %s6 = ssub.s32 1, %s4
  %s7 = scalar_select 0, %s6, %s4
  // Predicated region
  $region2: #{stgcn_block_forward.6} parent=0 // pred_check
    _
  $region3: #{stgcn_block_forward.6} parent=0 // pred_check_branch
    %9 = sbr.rel (0) target = $region5
  $region4: #{stgcn_block_forward.6} parent=0 // pred_region
    _
  $region5: #{stgcn_block_forward.6} parent=0 // pred_fallthru
    _
  // Predicated region
  $region6: #{stgcn_block_forward.6} parent=0 // pred_check
    _
  $region7: #{stgcn_block_forward.6} parent=0 // pred_check_branch
    %11 = sbr.rel (0) target = $region9
  $region8: #{stgcn_block_forward.6} parent=0 // pred_region
    _
  $region9: #{stgcn_block_forward.6} parent=0 // pred_fallthru
    _
  // Predicated region
  $region10: #{stgcn_block_forward.6} parent=0 // pred_check
    _
  $region11: #{stgcn_block_forward.6} parent=0 // pred_check_branch
    %13 = sbr.rel (0) target = $region13
  $region12: #{stgcn_block_forward.6} parent=0 // pred_region
    _
  $region13: #{stgcn_block_forward.6} parent=0 // pred_fallthru
    _
  %v14 = vld [vmem:[%s0] sm:$0xff]
  %v15 = vld [vmem:[%s0 + $0x8] sm:$0xff]
  %v16 = vld [vmem:[%s0 + $0x10] sm:$0xff]
  %v17 = vld [vmem:[%s0 + $0x18] sm:$0xff]
  %v18 = vld [vmem:[%s0 + $0x20] sm:$0xff]
  %v19 = vld [vmem:[%s0 + $0x28] sm:$0xff]
  %v20 = vld [vmem:[%s0 + $0x30] sm:$0xff]
  %v21 = vld [vmem:[%s0 + $0x38] sm:$0xff]
  %v22 = vld [vmem:[%s0 + $0x40] sm:$0xff]
  %v23 = vld [vmem:[%s0 + $0x48] sm:$0xff]
  %v24 = vld [vmem:[%s0 + $0x50] sm:$0xff]
  %v25 = vld [vmem:[%s0 + $0x58] sm:$0xff]
  %v26 = vld [vmem:[%s0 + $0x60] sm:$0xff]
  %v27 = vld [vmem:[%s0 + $0x68] sm:$0xff]
  %v28 = vld [vmem:[%s0 + $0x70] sm:$0xff]
  %v29 = vld [vmem:[%s0 + $0x78] sm:$0xff]
  %v30 = vld [vmem:[%s0 + $0x80] sm:$0xff]
  %v31 = vld [vmem:[%s0 + $0x88] sm:$0xff]
  %v32 = vld [vmem:[%s0 + $0x90] sm:$0xff]
  %v33 = vld [vmem:[%s0 + $0x98] sm:$0xff]
  %v34 = vld [vmem:[%s0 + $0xa0] sm:$0xff]
  %v35 = vld [vmem:[%s0 + $0xa8] sm:$0xff]
  %v36 = vld [vmem:[%s0 + $0xb0] sm:$0xff]
  %v37 = vld [vmem:[%s0 + $0xb8] sm:$0xff]
  %v38 = vld [vmem:[%s0 + $0xc0] sm:$0xff]
  %v39 = vld [vmem:[%s0 + $0xc8] sm:$0xff]
  %v40 = vld [vmem:[%s0 + $0xd0] sm:$0xff]
  %v41 = vld [vmem:[%s0 + $0xd8] sm:$0xff]
  %v42 = vld [vmem:[%s0 + $0xe0] sm:$0xff]
  %v43 = vld [vmem:[%s0 + $0xe8] sm:$0xff]
  %v44 = vld [vmem:[%s0 + $0xf0] sm:$0xff]
  %v45 = vld [vmem:[%s0 + $0xf8] sm:$0xff]
  %v46 = vld [vmem:[%s1] sm:$0xff]
  %v47 = vld [vmem:[%s1 + $0x8] sm:$0xff]
  %v48 = vld [vmem:[%s1 + $0x10] sm:$0xff]
  %v49 = vld [vmem:[%s2] sm:$0x1]
  %v51 = vlaneseq
  %v52 = vshrl.u32 %v51, 7
  %v53 = vsub.s32 0, %v52
  %v54 = vrot.slane %v49, %v53
  %vm56 = vcmask 195584
  %v58 = vsel %vm56, %v14, 0
  %v61 = vsel %vm56, %v15, 0
  %v64 = vsel %vm56, %v16, 0
  %v67 = vsel %vm56, %v17, 0
  %v70 = vsel %vm56, %v18, 0
  %v73 = vsel %vm56, %v19, 0
  %v76 = vsel %vm56, %v20, 0
  %v79 = vsel %vm56, %v21, 0
  %v82 = vsel %vm56, %v22, 0
  %v85 = vsel %vm56, %v23, 0
  %v88 = vsel %vm56, %v24, 0
  %v91 = vsel %vm56, %v25, 0
  %v94 = vsel %vm56, %v26, 0
  %v97 = vsel %vm56, %v27, 0
  %v100 = vsel %vm56, %v28, 0
  %v103 = vsel %vm56, %v29, 0
  %v106 = vsel %vm56, %v30, 0
  %v109 = vsel %vm56, %v31, 0
  %v112 = vsel %vm56, %v32, 0
  %v115 = vsel %vm56, %v33, 0
  %v118 = vsel %vm56, %v34, 0
  %v121 = vsel %vm56, %v35, 0
  %v124 = vsel %vm56, %v36, 0
  %v127 = vsel %vm56, %v37, 0
  %v130 = vsel %vm56, %v38, 0
  %v133 = vsel %vm56, %v39, 0
  %v136 = vsel %vm56, %v40, 0
  %v139 = vsel %vm56, %v41, 0
  %v142 = vsel %vm56, %v42, 0
  %v145 = vsel %vm56, %v43, 0
  %v148 = vsel %vm56, %v44, 0
  %v151 = vsel %vm56, %v45, 0
  %153 = vmatprep.subr.mxu0 0.0
  %154 = vmatpush1.msra.mxu0 %v46
  %155 = vmatprep.subr.mxu0 0.0
  %156 = vmatpush1.msra.mxu0 %v47
  %157 = vmatprep.subr.mxu0 0.0
  %158 = vmatpush1.msra.mxu0 %v48
  %159 = vmatprep.subr.mxu0 0.0
  %160 = vmatpush1.msra.mxu0 0.0
  %161 = vmatprep.subr.mxu0 0.0
  %162 = vmatpush1.msra.mxu0 0.0
  %163 = vmatprep.subr.mxu0 0.0
  %164 = vmatpush1.msra.mxu0 0.0
  %165 = vmatprep.subr.mxu0 0.0
  %166 = vmatpush1.msra.mxu0 0.0
  %167 = vmatprep.subr.mxu0 0.0
  %168 = vmatpush1.msra.mxu0 0.0
  %169 = vmatprep.subr.mxu0 0.0
  %170 = vmatpush1.msra.mxu0 0.0
  %171 = vmatprep.subr.mxu0 0.0
  %172 = vmatpush1.msra.mxu0 0.0
  %173 = vmatprep.subr.mxu0 0.0
  %174 = vmatpush1.msra.mxu0 0.0
  %175 = vmatprep.subr.mxu0 0.0
  %176 = vmatpush1.msra.mxu0 0.0
  %177 = vmatprep.subr.mxu0 0.0
  %178 = vmatpush1.msra.mxu0 0.0
  %179 = vmatprep.subr.mxu0 0.0
  %180 = vmatpush1.msra.mxu0 0.0
  %181 = vmatprep.subr.mxu0 0.0
  %182 = vmatpush1.msra.mxu0 0.0
  %183 = vmatprep.subr.mxu0 0.0
  %184 = vmatpush1.msra.mxu0 0.0
  %185 = vmatprep.subr.mxu0 0.0
  %186 = vmatpush1.msra.mxu0 0.0
  %187 = vmatprep.subr.mxu0 0.0
  %188 = vmatpush1.msra.mxu0 0.0
  %189 = vmatprep.subr.mxu0 0.0
  %190 = vmatpush1.msra.mxu0 0.0
  %191 = vmatprep.subr.mxu0 0.0
  %192 = vmatpush1.msra.mxu0 0.0
  %193 = vmatprep.subr.mxu0 0.0
  %194 = vmatpush1.msra.mxu0 0.0
  %195 = vmatprep.subr.mxu0 0.0
  %196 = vmatpush1.msra.mxu0 0.0
  %197 = vmatprep.subr.mxu0 0.0
  %198 = vmatpush1.msra.mxu0 0.0
  %199 = vmatprep.subr.mxu0 0.0
  %200 = vmatpush1.msra.mxu0 0.0
  %201 = vmatprep.subr.mxu0 0.0
  %202 = vmatpush1.msra.mxu0 0.0
  %203 = vmatprep.subr.mxu0 0.0
  %204 = vmatpush1.msra.mxu0 0.0
  %205 = vmatprep.subr.mxu0 0.0
  %206 = vmatpush1.msra.mxu0 0.0
  %207 = vmatprep.subr.mxu0 0.0
  %208 = vmatpush1.msra.mxu0 0.0
  %209 = vmatprep.subr.mxu0 0.0
  %210 = vmatpush1.msra.mxu0 0.0
  %211 = vmatprep.subr.mxu0 0.0
  %212 = vmatpush1.msra.mxu0 0.0
  %213 = vmatprep.subr.mxu0 0.0
  %214 = vmatpush1.msra.mxu0 0.0
  %215 = vmatprep.subr.mxu0 0.0
  %216 = vmatpush1.msra.mxu0 0.0
  %217 = vmatprep.mubr.f32.mxu0 0.0
  %218 = vmatmul.mubr.f32.gmra.mrb[0].mxu0 %v58
  %v219 = vpop.f32.mrb[0].mxu0
  %v220 = vadd.f32 %v54, %v219
  %v221 = vpop.f32.mrb[0].mxu0
  %222 = vmatprep.mubr.f32.mxu0 0.0
  %223 = vmatmul.mubr.f32.gmra.mrb[0].mxu0 %v61
  %v224 = vpop.f32.mrb[0].mxu0
  %v225 = vadd.f32 %v54, %v224
  %v226 = vpop.f32.mrb[0].mxu0
  %227 = vmatprep.mubr.f32.mxu0 0.0
  %228 = vmatmul.mubr.f32.gmra.mrb[0].mxu0 %v64
  %v229 = vpop.f32.mrb[0].mxu0
  %v230 = vadd.f32 %v54, %v229
  %v231 = vpop.f32.mrb[0].mxu0
  %232 = vmatprep.mubr.f32.mxu0 0.0
  %233 = vmatmul.mubr.f32.gmra.mrb[0].mxu0 %v67
  %v234 = vpop.f32.mrb[0].mxu0
  %v235 = vadd.f32 %v54, %v234
  %v236 = vpop.f32.mrb[0].mxu0
  %237 = vmatprep.mubr.f32.mxu0 0.0
  %238 = vmatmul.mubr.f32.gmra.mrb[0].mxu0 %v70
  %v239 = vpop.f32.mrb[0].mxu0
  %v240 = vadd.f32 %v54, %v239
  %v241 = vpop.f32.mrb[0].mxu0
  %242 = vmatprep.mubr.f32.mxu0 0.0
  %243 = vmatmul.mubr.f32.gmra.mrb[0].mxu0 %v73
  %v244 = vpop.f32.mrb[0].mxu0
  %v245 = vadd.f32 %v54, %v244
  %v246 = vpop.f32.mrb[0].mxu0
  %247 = vmatprep.mubr.f32.mxu0 0.0
  %248 = vmatmul.mubr.f32.gmra.mrb[0].mxu0 %v76
  %v249 = vpop.f32.mrb[0].mxu0
  %v250 = vadd.f32 %v54, %v249
  %v251 = vpop.f32.mrb[0].mxu0
  %252 = vmatprep.mubr.f32.mxu0 0.0
  %253 = vmatmul.mubr.f32.gmra.mrb[0].mxu0 %v79
  %v254 = vpop.f32.mrb[0].mxu0
  %v255 = vadd.f32 %v54, %v254
  %v256 = vpop.f32.mrb[0].mxu0
  %257 = vmatprep.mubr.f32.mxu0 0.0
  %258 = vmatmul.mubr.f32.gmra.mrb[0].mxu0 %v82
  %v259 = vpop.f32.mrb[0].mxu0
  %v260 = vadd.f32 %v54, %v259
  %v261 = vpop.f32.mrb[0].mxu0
  %262 = vmatprep.mubr.f32.mxu0 0.0
  %263 = vmatmul.mubr.f32.gmra.mrb[0].mxu0 %v85
  %v264 = vpop.f32.mrb[0].mxu0
  %v265 = vadd.f32 %v54, %v264
  %v266 = vpop.f32.mrb[0].mxu0
  %267 = vmatprep.mubr.f32.mxu0 0.0
  %268 = vmatmul.mubr.f32.gmra.mrb[0].mxu0 %v88
  %v269 = vpop.f32.mrb[0].mxu0
  %v270 = vadd.f32 %v54, %v269
  %v271 = vpop.f32.mrb[0].mxu0
  %272 = vmatprep.mubr.f32.mxu0 0.0
  %273 = vmatmul.mubr.f32.gmra.mrb[0].mxu0 %v91
  %v274 = vpop.f32.mrb[0].mxu0
  %v275 = vadd.f32 %v54, %v274
  %v276 = vpop.f32.mrb[0].mxu0
  %277 = vmatprep.mubr.f32.mxu0 0.0
  %278 = vmatmul.mubr.f32.gmra.mrb[0].mxu0 %v94
  %v279 = vpop.f32.mrb[0].mxu0
  %v280 = vadd.f32 %v54, %v279
  %v281 = vpop.f32.mrb[0].mxu0
  %282 = vmatprep.mubr.f32.mxu0 0.0
  %283 = vmatmul.mubr.f32.gmra.mrb[0].mxu0 %v97
  %v284 = vpop.f32.mrb[0].mxu0
  %v285 = vadd.f32 %v54, %v284
  %v286 = vpop.f32.mrb[0].mxu0
  %287 = vmatprep.mubr.f32.mxu0 0.0
  %288 = vmatmul.mubr.f32.gmra.mrb[0].mxu0 %v100
  %v289 = vpop.f32.mrb[0].mxu0
  %v290 = vadd.f32 %v54, %v289
  %v291 = vpop.f32.mrb[0].mxu0
  %292 = vmatprep.mubr.f32.mxu0 0.0
  %293 = vmatmul.mubr.f32.gmra.mrb[0].mxu0 %v103
  %v294 = vpop.f32.mrb[0].mxu0
  %v295 = vadd.f32 %v54, %v294
  %v296 = vpop.f32.mrb[0].mxu0
  %297 = vmatprep.mubr.f32.mxu0 0.0
  %298 = vmatmul.mubr.f32.gmra.mrb[0].mxu0 %v106
  %v299 = vpop.f32.mrb[0].mxu0
  %v300 = vadd.f32 %v54, %v299
  %v301 = vpop.f32.mrb[0].mxu0
  %302 = vmatprep.mubr.f32.mxu0 0.0
  %303 = vmatmul.mubr.f32.gmra.mrb[0].mxu0 %v109
  %v304 = vpop.f32.mrb[0].mxu0
  %v305 = vadd.f32 %v54, %v304
  %v306 = vpop.f32.mrb[0].mxu0
  %307 = vmatprep.mubr.f32.mxu0 0.0
  %308 = vmatmul.mubr.f32.gmra.mrb[0].mxu0 %v112
  %v309 = vpop.f32.mrb[0].mxu0
  %v310 = vadd.f32 %v54, %v309
  %v311 = vpop.f32.mrb[0].mxu0
  %312 = vmatprep.mubr.f32.mxu0 0.0
  %313 = vmatmul.mubr.f32.gmra.mrb[0].mxu0 %v115
  %v314 = vpop.f32.mrb[0].mxu0
  %v315 = vadd.f32 %v54, %v314
  %v316 = vpop.f32.mrb[0].mxu0
  %317 = vmatprep.mubr.f32.mxu0 0.0
  %318 = vmatmul.mubr.f32.gmra.mrb[0].mxu0 %v118
  %v319 = vpop.f32.mrb[0].mxu0
  %v320 = vadd.f32 %v54, %v319
  %v321 = vpop.f32.mrb[0].mxu0
  %322 = vmatprep.mubr.f32.mxu0 0.0
  %323 = vmatmul.mubr.f32.gmra.mrb[0].mxu0 %v121
  %v324 = vpop.f32.mrb[0].mxu0
  %v325 = vadd.f32 %v54, %v324
  %v326 = vpop.f32.mrb[0].mxu0
  %327 = vmatprep.mubr.f32.mxu0 0.0
  %328 = vmatmul.mubr.f32.gmra.mrb[0].mxu0 %v124
  %v329 = vpop.f32.mrb[0].mxu0
  %v330 = vadd.f32 %v54, %v329
  %v331 = vpop.f32.mrb[0].mxu0
  %332 = vmatprep.mubr.f32.mxu0 0.0
  %333 = vmatmul.mubr.f32.gmra.mrb[0].mxu0 %v127
  %v334 = vpop.f32.mrb[0].mxu0
  %v335 = vadd.f32 %v54, %v334
  %v336 = vpop.f32.mrb[0].mxu0
  %337 = vmatprep.mubr.f32.mxu0 0.0
  %338 = vmatmul.mubr.f32.gmra.mrb[0].mxu0 %v130
  %v339 = vpop.f32.mrb[0].mxu0
  %v340 = vadd.f32 %v54, %v339
  %v341 = vpop.f32.mrb[0].mxu0
  %342 = vmatprep.mubr.f32.mxu0 0.0
  %343 = vmatmul.mubr.f32.gmra.mrb[0].mxu0 %v133
  %v344 = vpop.f32.mrb[0].mxu0
  %v345 = vadd.f32 %v54, %v344
  %v346 = vpop.f32.mrb[0].mxu0
  %347 = vmatprep.mubr.f32.mxu0 0.0
  %348 = vmatmul.mubr.f32.gmra.mrb[0].mxu0 %v136
  %v349 = vpop.f32.mrb[0].mxu0
  %v350 = vadd.f32 %v54, %v349
  %v351 = vpop.f32.mrb[0].mxu0
  %352 = vmatprep.mubr.f32.mxu0 0.0
  %353 = vmatmul.mubr.f32.gmra.mrb[0].mxu0 %v139
  %v354 = vpop.f32.mrb[0].mxu0
  %v355 = vadd.f32 %v54, %v354
  %v356 = vpop.f32.mrb[0].mxu0
  %357 = vmatprep.mubr.f32.mxu0 0.0
  %358 = vmatmul.mubr.f32.gmra.mrb[0].mxu0 %v142
  %v359 = vpop.f32.mrb[0].mxu0
  %v360 = vadd.f32 %v54, %v359
  %v361 = vpop.f32.mrb[0].mxu0
  %362 = vmatprep.mubr.f32.mxu0 0.0
  %363 = vmatmul.mubr.f32.gmra.mrb[0].mxu0 %v145
  %v364 = vpop.f32.mrb[0].mxu0
  %v365 = vadd.f32 %v54, %v364
  %v366 = vpop.f32.mrb[0].mxu0
  %367 = vmatprep.mubr.f32.mxu0 0.0
  %368 = vmatmul.mubr.f32.gmra.mrb[0].mxu0 %v148
  %v369 = vpop.f32.mrb[0].mxu0
  %v370 = vadd.f32 %v54, %v369
  %v371 = vpop.f32.mrb[0].mxu0
  %372 = vmatprep.mubr.f32.mxu0 0.0
  %373 = vmatmul.mubr.f32.gmra.mrb[0].mxu0 %v151
  %v374 = vpop.f32.mrb[0].mxu0
  %v375 = vadd.f32 %v54, %v374
  %v376 = vpop.f32.mrb[0].mxu0
  %377 = vdwg.mxu0
  %v378 = vxor.u32 %v220, 2147483648
  %v379 = vxor.u32 %v225, 2147483648
  %v380 = vxor.u32 %v230, 2147483648
  %v381 = vxor.u32 %v235, 2147483648
  %v382 = vxor.u32 %v240, 2147483648
  %v383 = vxor.u32 %v245, 2147483648
  %v384 = vxor.u32 %v250, 2147483648
  %v385 = vxor.u32 %v255, 2147483648
  %v386 = vxor.u32 %v260, 2147483648
  %v387 = vxor.u32 %v265, 2147483648
  %v388 = vxor.u32 %v270, 2147483648
  %v389 = vxor.u32 %v275, 2147483648
  %v390 = vxor.u32 %v280, 2147483648
  %v391 = vxor.u32 %v285, 2147483648
  %v392 = vxor.u32 %v290, 2147483648
  %v393 = vxor.u32 %v295, 2147483648
  %v394 = vxor.u32 %v300, 2147483648
  %v395 = vxor.u32 %v305, 2147483648
  %v396 = vxor.u32 %v310, 2147483648
  %v397 = vxor.u32 %v315, 2147483648
  %v398 = vxor.u32 %v320, 2147483648
  %v399 = vxor.u32 %v325, 2147483648
  %v400 = vxor.u32 %v330, 2147483648
  %v401 = vxor.u32 %v335, 2147483648
  %v402 = vxor.u32 %v340, 2147483648
  %v403 = vxor.u32 %v345, 2147483648
  %v404 = vxor.u32 %v350, 2147483648
  %v405 = vxor.u32 %v355, 2147483648
  %v406 = vxor.u32 %v360, 2147483648
  %v407 = vxor.u32 %v365, 2147483648
  %v408 = vxor.u32 %v370, 2147483648
  %v409 = vxor.u32 %v375, 2147483648
  %v410 = vmul.f32 %v378, 1.442695
  %v411 = vpow.pop %v410
  %v412 = vmul.f32 %v379, 1.442695
  %v413 = vpow.pop %v412
  %v414 = vmul.f32 %v380, 1.442695
  %v415 = vpow.pop %v414
  %v416 = vmul.f32 %v381, 1.442695
  %v417 = vpow.pop %v416
  %v418 = vmul.f32 %v382, 1.442695
  %v419 = vpow.pop %v418
  %v420 = vmul.f32 %v383, 1.442695
  %v421 = vpow.pop %v420
  %v422 = vmul.f32 %v384, 1.442695
  %v423 = vpow.pop %v422
  %v424 = vmul.f32 %v385, 1.442695
  %v425 = vpow.pop %v424
  %v426 = vmul.f32 %v386, 1.442695
  %v427 = vpow.pop %v426
  %v428 = vmul.f32 %v387, 1.442695
  %v429 = vpow.pop %v428
  %v430 = vmul.f32 %v388, 1.442695
  %v431 = vpow.pop %v430
  %v432 = vmul.f32 %v389, 1.442695
  %v433 = vpow.pop %v432
  %v434 = vmul.f32 %v390, 1.442695
  %v435 = vpow.pop %v434
  %v436 = vmul.f32 %v391, 1.442695
  %v437 = vpow.pop %v436
  %v438 = vmul.f32 %v392, 1.442695
  %v439 = vpow.pop %v438
  %v440 = vmul.f32 %v393, 1.442695
  %v441 = vpow.pop %v440
  %v442 = vmul.f32 %v394, 1.442695
  %v443 = vpow.pop %v442
  %v444 = vmul.f32 %v395, 1.442695
  %v445 = vpow.pop %v444
  %v446 = vmul.f32 %v396, 1.442695
  %v447 = vpow.pop %v446
  %v448 = vmul.f32 %v397, 1.442695
  %v449 = vpow.pop %v448
  %v450 = vmul.f32 %v398, 1.442695
  %v451 = vpow.pop %v450
  %v452 = vmul.f32 %v399, 1.442695
  %v453 = vpow.pop %v452
  %v454 = vmul.f32 %v400, 1.442695
  %v455 = vpow.pop %v454
  %v456 = vmul.f32 %v401, 1.442695
  %v457 = vpow.pop %v456
  %v458 = vmul.f32 %v402, 1.442695
  %v459 = vpow.pop %v458
  %v460 = vmul.f32 %v403, 1.442695
  %v461 = vpow.pop %v460
  %v462 = vmul.f32 %v404, 1.442695
  %v463 = vpow.pop %v462
  %v464 = vmul.f32 %v405, 1.442695
  %v465 = vpow.pop %v464
  %v466 = vmul.f32 %v406, 1.442695
  %v467 = vpow.pop %v466
  %v468 = vmul.f32 %v407, 1.442695
  %v469 = vpow.pop %v468
  %v470 = vmul.f32 %v408, 1.442695
  %v471 = vpow.pop %v470
  %v472 = vmul.f32 %v409, 1.442695
  %v473 = vpow.pop %v472
  %v474 = vadd.f32 %v411, 1.0
  %v475 = vadd.f32 %v413, 1.0
  %v476 = vadd.f32 %v415, 1.0
  %v477 = vadd.f32 %v417, 1.0
  %v478 = vadd.f32 %v419, 1.0
  %v479 = vadd.f32 %v421, 1.0
  %v480 = vadd.f32 %v423, 1.0
  %v481 = vadd.f32 %v425, 1.0
  %v482 = vadd.f32 %v427, 1.0
  %v483 = vadd.f32 %v429, 1.0
  %v484 = vadd.f32 %v431, 1.0
  %v485 = vadd.f32 %v433, 1.0
  %v486 = vadd.f32 %v435, 1.0
  %v487 = vadd.f32 %v437, 1.0
  %v488 = vadd.f32 %v439, 1.0
  %v489 = vadd.f32 %v441, 1.0
  %v490 = vadd.f32 %v443, 1.0
  %v491 = vadd.f32 %v445, 1.0
  %v492 = vadd.f32 %v447, 1.0
  %v493 = vadd.f32 %v449, 1.0
  %v494 = vadd.f32 %v451, 1.0
  %v495 = vadd.f32 %v453, 1.0
  %v496 = vadd.f32 %v455, 1.0
  %v497 = vadd.f32 %v457, 1.0
  %v498 = vadd.f32 %v459, 1.0
  %v499 = vadd.f32 %v461, 1.0
  %v500 = vadd.f32 %v463, 1.0
  %v501 = vadd.f32 %v465, 1.0
  %v502 = vadd.f32 %v467, 1.0
  %v503 = vadd.f32 %v469, 1.0
  %v504 = vadd.f32 %v471, 1.0
  %v505 = vadd.f32 %v473, 1.0
  %v506 = vrcp.pop %v474
  %v507 = vmul.f32 1.0, %v506
  %v508 = vrcp.pop %v475
  %v509 = vmul.f32 1.0, %v508
  %v510 = vrcp.pop %v476
  %v511 = vmul.f32 1.0, %v510
  %v512 = vrcp.pop %v477
  %v513 = vmul.f32 1.0, %v512
  %v514 = vrcp.pop %v478
  %v515 = vmul.f32 1.0, %v514
  %v516 = vrcp.pop %v479
  %v517 = vmul.f32 1.0, %v516
  %v518 = vrcp.pop %v480
  %v519 = vmul.f32 1.0, %v518
  %v520 = vrcp.pop %v481
  %v521 = vmul.f32 1.0, %v520
  %v522 = vrcp.pop %v482
  %v523 = vmul.f32 1.0, %v522
  %v524 = vrcp.pop %v483
  %v525 = vmul.f32 1.0, %v524
  %v526 = vrcp.pop %v484
  %v527 = vmul.f32 1.0, %v526
  %v528 = vrcp.pop %v485
  %v529 = vmul.f32 1.0, %v528
  %v530 = vrcp.pop %v486
  %v531 = vmul.f32 1.0, %v530
  %v532 = vrcp.pop %v487
  %v533 = vmul.f32 1.0, %v532
  %v534 = vrcp.pop %v488
  %v535 = vmul.f32 1.0, %v534
  %v536 = vrcp.pop %v489
  %v537 = vmul.f32 1.0, %v536
  %v538 = vrcp.pop %v490
  %v539 = vmul.f32 1.0, %v538
  %v540 = vrcp.pop %v491
  %v541 = vmul.f32 1.0, %v540
  %v542 = vrcp.pop %v492
  %v543 = vmul.f32 1.0, %v542
  %v544 = vrcp.pop %v493
  %v545 = vmul.f32 1.0, %v544
  %v546 = vrcp.pop %v494
  %v547 = vmul.f32 1.0, %v546
  %v548 = vrcp.pop %v495
  %v549 = vmul.f32 1.0, %v548
  %v550 = vrcp.pop %v496
  %v551 = vmul.f32 1.0, %v550
  %v552 = vrcp.pop %v497
  %v553 = vmul.f32 1.0, %v552
  %v554 = vrcp.pop %v498
  %v555 = vmul.f32 1.0, %v554
  %v556 = vrcp.pop %v499
  %v557 = vmul.f32 1.0, %v556
  %v558 = vrcp.pop %v500
  %v559 = vmul.f32 1.0, %v558
  %v560 = vrcp.pop %v501
  %v561 = vmul.f32 1.0, %v560
  %v562 = vrcp.pop %v502
  %v563 = vmul.f32 1.0, %v562
  %v564 = vrcp.pop %v503
  %v565 = vmul.f32 1.0, %v564
  %v566 = vrcp.pop %v504
  %v567 = vmul.f32 1.0, %v566
  %v568 = vrcp.pop %v505
  %v569 = vmul.f32 1.0, %v568
  %602 = vrot.lane.b32.xlu0 %v507, 112
  %v603 = vpop.permute.xlu0 %602
  %604 = vrot.lane.b32.xlu0 %v509, 112
  %v605 = vpop.permute.xlu0 %604
  %606 = vrot.lane.b32.xlu0 %v511, 112
  %v607 = vpop.permute.xlu0 %606
  %608 = vrot.lane.b32.xlu0 %v513, 112
  %v609 = vpop.permute.xlu0 %608
  %610 = vrot.lane.b32.xlu0 %v515, 112
  %v611 = vpop.permute.xlu0 %610
  %612 = vrot.lane.b32.xlu0 %v517, 112
  %v613 = vpop.permute.xlu0 %612
  %614 = vrot.lane.b32.xlu0 %v519, 112
  %v615 = vpop.permute.xlu0 %614
  %616 = vrot.lane.b32.xlu0 %v521, 112
  %v617 = vpop.permute.xlu0 %616
  %618 = vrot.lane.b32.xlu0 %v523, 112
  %v619 = vpop.permute.xlu0 %618
  %620 = vrot.lane.b32.xlu0 %v525, 112
  %v621 = vpop.permute.xlu0 %620
  %622 = vrot.lane.b32.xlu0 %v527, 112
  %v623 = vpop.permute.xlu0 %622
  %624 = vrot.lane.b32.xlu0 %v529, 112
  %v625 = vpop.permute.xlu0 %624
  %626 = vrot.lane.b32.xlu0 %v531, 112
  %v627 = vpop.permute.xlu0 %626
  %628 = vrot.lane.b32.xlu0 %v533, 112
  %v629 = vpop.permute.xlu0 %628
  %630 = vrot.lane.b32.xlu0 %v535, 112
  %v631 = vpop.permute.xlu0 %630
  %632 = vrot.lane.b32.xlu0 %v537, 112
  %v633 = vpop.permute.xlu0 %632
  %634 = vrot.lane.b32.xlu0 %v539, 112
  %v635 = vpop.permute.xlu0 %634
  %636 = vrot.lane.b32.xlu0 %v541, 112
  %v637 = vpop.permute.xlu0 %636
  %638 = vrot.lane.b32.xlu0 %v543, 112
  %v639 = vpop.permute.xlu0 %638
  %640 = vrot.lane.b32.xlu0 %v545, 112
  %v641 = vpop.permute.xlu0 %640
  %642 = vrot.lane.b32.xlu0 %v547, 112
  %v643 = vpop.permute.xlu0 %642
  %644 = vrot.lane.b32.xlu0 %v549, 112
  %v645 = vpop.permute.xlu0 %644
  %646 = vrot.lane.b32.xlu0 %v551, 112
  %v647 = vpop.permute.xlu0 %646
  %648 = vrot.lane.b32.xlu0 %v553, 112
  %v649 = vpop.permute.xlu0 %648
  %650 = vrot.lane.b32.xlu0 %v555, 112
  %v651 = vpop.permute.xlu0 %650
  %652 = vrot.lane.b32.xlu0 %v557, 112
  %v653 = vpop.permute.xlu0 %652
  %654 = vrot.lane.b32.xlu0 %v559, 112
  %v655 = vpop.permute.xlu0 %654
  %656 = vrot.lane.b32.xlu0 %v561, 112
  %v657 = vpop.permute.xlu0 %656
  %658 = vrot.lane.b32.xlu0 %v563, 112
  %v659 = vpop.permute.xlu0 %658
  %660 = vrot.lane.b32.xlu0 %v565, 112
  %v661 = vpop.permute.xlu0 %660
  %662 = vrot.lane.b32.xlu0 %v567, 112
  %v663 = vpop.permute.xlu0 %662
  %664 = vrot.lane.b32.xlu0 %v569, 112
  %v665 = vpop.permute.xlu0 %664
  %v698 = vadd.f32 %v220, %v603
  %v699 = vadd.f32 %v225, %v605
  %v700 = vadd.f32 %v230, %v607
  %v701 = vadd.f32 %v235, %v609
  %v702 = vadd.f32 %v240, %v611
  %v703 = vadd.f32 %v245, %v613
  %v704 = vadd.f32 %v250, %v615
  %v705 = vadd.f32 %v255, %v617
  %v706 = vadd.f32 %v260, %v619
  %v707 = vadd.f32 %v265, %v621
  %v708 = vadd.f32 %v270, %v623
  %v709 = vadd.f32 %v275, %v625
  %v710 = vadd.f32 %v280, %v627
  %v711 = vadd.f32 %v285, %v629
  %v712 = vadd.f32 %v290, %v631
  %v713 = vadd.f32 %v295, %v633
  %v714 = vadd.f32 %v300, %v635
  %v715 = vadd.f32 %v305, %v637
  %v716 = vadd.f32 %v310, %v639
  %v717 = vadd.f32 %v315, %v641
  %v718 = vadd.f32 %v320, %v643
  %v719 = vadd.f32 %v325, %v645
  %v720 = vadd.f32 %v330, %v647
  %v721 = vadd.f32 %v335, %v649
  %v722 = vadd.f32 %v340, %v651
  %v723 = vadd.f32 %v345, %v653
  %v724 = vadd.f32 %v350, %v655
  %v725 = vadd.f32 %v355, %v657
  %v726 = vadd.f32 %v360, %v659
  %v727 = vadd.f32 %v365, %v661
  %v728 = vadd.f32 %v370, %v663
  %v729 = vadd.f32 %v375, %v665
  %762 = vrot.lane.b32.xlu0 %v220, 96
  %v763 = vpop.permute.xlu0 %762
  %764 = vrot.lane.b32.xlu0 %v225, 96
  %v765 = vpop.permute.xlu0 %764
  %766 = vrot.lane.b32.xlu0 %v230, 96
  %v767 = vpop.permute.xlu0 %766
  %768 = vrot.lane.b32.xlu0 %v235, 96
  %v769 = vpop.permute.xlu0 %768
  %770 = vrot.lane.b32.xlu0 %v240, 96
  %v771 = vpop.permute.xlu0 %770
  %772 = vrot.lane.b32.xlu0 %v245, 96
  %v773 = vpop.permute.xlu0 %772
  %774 = vrot.lane.b32.xlu0 %v250, 96
  %v775 = vpop.permute.xlu0 %774
  %776 = vrot.lane.b32.xlu0 %v255, 96
  %v777 = vpop.permute.xlu0 %776
  %778 = vrot.lane.b32.xlu0 %v260, 96
  %v779 = vpop.permute.xlu0 %778
  %780 = vrot.lane.b32.xlu0 %v265, 96
  %v781 = vpop.permute.xlu0 %780
  %782 = vrot.lane.b32.xlu0 %v270, 96
  %v783 = vpop.permute.xlu0 %782
  %784 = vrot.lane.b32.xlu0 %v275, 96
  %v785 = vpop.permute.xlu0 %784
  %786 = vrot.lane.b32.xlu0 %v280, 96
  %v787 = vpop.permute.xlu0 %786
  %788 = vrot.lane.b32.xlu0 %v285, 96
  %v789 = vpop.permute.xlu0 %788
  %790 = vrot.lane.b32.xlu0 %v290, 96
  %v791 = vpop.permute.xlu0 %790
  %792 = vrot.lane.b32.xlu0 %v295, 96
  %v793 = vpop.permute.xlu0 %792
  %794 = vrot.lane.b32.xlu0 %v300, 96
  %v795 = vpop.permute.xlu0 %794
  %796 = vrot.lane.b32.xlu0 %v305, 96
  %v797 = vpop.permute.xlu0 %796
  %798 = vrot.lane.b32.xlu0 %v310, 96
  %v799 = vpop.permute.xlu0 %798
  %800 = vrot.lane.b32.xlu0 %v315, 96
  %v801 = vpop.permute.xlu0 %800
  %802 = vrot.lane.b32.xlu0 %v320, 96
  %v803 = vpop.permute.xlu0 %802
  %804 = vrot.lane.b32.xlu0 %v325, 96
  %v805 = vpop.permute.xlu0 %804
  %806 = vrot.lane.b32.xlu0 %v330, 96
  %v807 = vpop.permute.xlu0 %806
  %808 = vrot.lane.b32.xlu0 %v335, 96
  %v809 = vpop.permute.xlu0 %808
  %810 = vrot.lane.b32.xlu0 %v340, 96
  %v811 = vpop.permute.xlu0 %810
  %812 = vrot.lane.b32.xlu0 %v345, 96
  %v813 = vpop.permute.xlu0 %812
  %814 = vrot.lane.b32.xlu0 %v350, 96
  %v815 = vpop.permute.xlu0 %814
  %816 = vrot.lane.b32.xlu0 %v355, 96
  %v817 = vpop.permute.xlu0 %816
  %818 = vrot.lane.b32.xlu0 %v360, 96
  %v819 = vpop.permute.xlu0 %818
  %820 = vrot.lane.b32.xlu0 %v365, 96
  %v821 = vpop.permute.xlu0 %820
  %822 = vrot.lane.b32.xlu0 %v370, 96
  %v823 = vpop.permute.xlu0 %822
  %824 = vrot.lane.b32.xlu0 %v375, 96
  %v825 = vpop.permute.xlu0 %824
  %v858 = vadd.f32 %v698, %v763
  %v859 = vadd.f32 %v699, %v765
  %v860 = vadd.f32 %v700, %v767
  %v861 = vadd.f32 %v701, %v769
  %v862 = vadd.f32 %v702, %v771
  %v863 = vadd.f32 %v703, %v773
  %v864 = vadd.f32 %v704, %v775
  %v865 = vadd.f32 %v705, %v777
  %v866 = vadd.f32 %v706, %v779
  %v867 = vadd.f32 %v707, %v781
  %v868 = vadd.f32 %v708, %v783
  %v869 = vadd.f32 %v709, %v785
  %v870 = vadd.f32 %v710, %v787
  %v871 = vadd.f32 %v711, %v789
  %v872 = vadd.f32 %v712, %v791
  %v873 = vadd.f32 %v713, %v793
  %v874 = vadd.f32 %v714, %v795
  %v875 = vadd.f32 %v715, %v797
  %v876 = vadd.f32 %v716, %v799
  %v877 = vadd.f32 %v717, %v801
  %v878 = vadd.f32 %v718, %v803
  %v879 = vadd.f32 %v719, %v805
  %v880 = vadd.f32 %v720, %v807
  %v881 = vadd.f32 %v721, %v809
  %v882 = vadd.f32 %v722, %v811
  %v883 = vadd.f32 %v723, %v813
  %v884 = vadd.f32 %v724, %v815
  %v885 = vadd.f32 %v725, %v817
  %v886 = vadd.f32 %v726, %v819
  %v887 = vadd.f32 %v727, %v821
  %v888 = vadd.f32 %v728, %v823
  %v889 = vadd.f32 %v729, %v825
  %v890 = vmax.f32 %v858, 0.0
  %v891 = vmax.f32 %v859, 0.0
  %v892 = vmax.f32 %v860, 0.0
  %v893 = vmax.f32 %v861, 0.0
  %v894 = vmax.f32 %v862, 0.0
  %v895 = vmax.f32 %v863, 0.0
  %v896 = vmax.f32 %v864, 0.0
  %v897 = vmax.f32 %v865, 0.0
  %v898 = vmax.f32 %v866, 0.0
  %v899 = vmax.f32 %v867, 0.0
  %v900 = vmax.f32 %v868, 0.0
  %v901 = vmax.f32 %v869, 0.0
  %v902 = vmax.f32 %v870, 0.0
  %v903 = vmax.f32 %v871, 0.0
  %v904 = vmax.f32 %v872, 0.0
  %v905 = vmax.f32 %v873, 0.0
  %v906 = vmax.f32 %v874, 0.0
  %v907 = vmax.f32 %v875, 0.0
  %v908 = vmax.f32 %v876, 0.0
  %v909 = vmax.f32 %v877, 0.0
  %v910 = vmax.f32 %v878, 0.0
  %v911 = vmax.f32 %v879, 0.0
  %v912 = vmax.f32 %v880, 0.0
  %v913 = vmax.f32 %v881, 0.0
  %v914 = vmax.f32 %v882, 0.0
  %v915 = vmax.f32 %v883, 0.0
  %v916 = vmax.f32 %v884, 0.0
  %v917 = vmax.f32 %v885, 0.0
  %v918 = vmax.f32 %v886, 0.0
  %v919 = vmax.f32 %v887, 0.0
  %v920 = vmax.f32 %v888, 0.0
  %v921 = vmax.f32 %v889, 0.0
  %vm922 = vcmask 130048
  %923 = vst.msk [vmem:[%s3] sm:$0xff] %vm922, %v890
  %924 = vst.msk [vmem:[%s3 + $0x8] sm:$0xff] %vm922, %v891
  %925 = vst.msk [vmem:[%s3 + $0x10] sm:$0xff] %vm922, %v892
  %926 = vst.msk [vmem:[%s3 + $0x18] sm:$0xff] %vm922, %v893
  %927 = vst.msk [vmem:[%s3 + $0x20] sm:$0xff] %vm922, %v894
  %928 = vst.msk [vmem:[%s3 + $0x28] sm:$0xff] %vm922, %v895
  %929 = vst.msk [vmem:[%s3 + $0x30] sm:$0xff] %vm922, %v896
  %930 = vst.msk [vmem:[%s3 + $0x38] sm:$0xff] %vm922, %v897
  %931 = vst.msk [vmem:[%s3 + $0x40] sm:$0xff] %vm922, %v898
  %932 = vst.msk [vmem:[%s3 + $0x48] sm:$0xff] %vm922, %v899
  %933 = vst.msk [vmem:[%s3 + $0x50] sm:$0xff] %vm922, %v900
  %934 = vst.msk [vmem:[%s3 + $0x58] sm:$0xff] %vm922, %v901
  %935 = vst.msk [vmem:[%s3 + $0x60] sm:$0xff] %vm922, %v902
  %936 = vst.msk [vmem:[%s3 + $0x68] sm:$0xff] %vm922, %v903
  %937 = vst.msk [vmem:[%s3 + $0x70] sm:$0xff] %vm922, %v904
  %938 = vst.msk [vmem:[%s3 + $0x78] sm:$0xff] %vm922, %v905
  %939 = vst.msk [vmem:[%s3 + $0x80] sm:$0xff] %vm922, %v906
  %940 = vst.msk [vmem:[%s3 + $0x88] sm:$0xff] %vm922, %v907
  %941 = vst.msk [vmem:[%s3 + $0x90] sm:$0xff] %vm922, %v908
  %942 = vst.msk [vmem:[%s3 + $0x98] sm:$0xff] %vm922, %v909
  %943 = vst.msk [vmem:[%s3 + $0xa0] sm:$0xff] %vm922, %v910
  %944 = vst.msk [vmem:[%s3 + $0xa8] sm:$0xff] %vm922, %v911
  %945 = vst.msk [vmem:[%s3 + $0xb0] sm:$0xff] %vm922, %v912
  %946 = vst.msk [vmem:[%s3 + $0xb8] sm:$0xff] %vm922, %v913
  %947 = vst.msk [vmem:[%s3 + $0xc0] sm:$0xff] %vm922, %v914
  %948 = vst.msk [vmem:[%s3 + $0xc8] sm:$0xff] %vm922, %v915
  %949 = vst.msk [vmem:[%s3 + $0xd0] sm:$0xff] %vm922, %v916
  %950 = vst.msk [vmem:[%s3 + $0xd8] sm:$0xff] %vm922, %v917
  %951 = vst.msk [vmem:[%s3 + $0xe0] sm:$0xff] %vm922, %v918
  %952 = vst.msk [vmem:[%s3 + $0xe8] sm:$0xff] %vm922, %v919
  %953 = vst.msk [vmem:[%s3 + $0xf0] sm:$0xff] %vm922, %v920
  %954 = vst.msk [vmem:[%s3 + $0xf8] sm:$0xff] %vm922, %v921
  // Predicated region
  $region14: #{stgcn_block_forward.6} parent=0 // pred_check
    _
  $region15: #{stgcn_block_forward.6} parent=0 // pred_check_branch
    %956 = sbr.rel (0) target = $region17
  $region16: #{stgcn_block_forward.6} parent=0 // pred_region
    _
  $region17: #{stgcn_block_forward.6} parent=0 // pred_fallthru
    _
  // Predicated region
  $region18: #{stgcn_block_forward.6} parent=0 // pred_check
    _
  $region19: #{stgcn_block_forward.6} parent=0 // pred_check_branch
    %958 = sbr.rel (0) target = $region21
  $region20: #{stgcn_block_forward.6} parent=0 // pred_region
    _
  $region21: #{stgcn_block_forward.6} parent=0 // pred_fallthru
    _

</llo_original>
